<compile_context>
chip_gen: v5e
topology: v5e:2x2
jax: 0.10.0
libtpu: 0.0.40
codegen_flags: <defaults>
</compile_context>

<pallas_src>
import jax
import jax.numpy as jnp
from jax.experimental import pallas as pl
from jax.experimental.pallas import tpu as pltpu


def _round_up(n: int, m: int) -> int:
    return ((n + m - 1) // m) * m


# ---------------------------------------------------------------------------
# Kernel: one batch tile per grid step, 4 fused matmuls (bf16 MXU, f32 acc).
# Weights/biases use constant index_maps -> DMA'd once, VMEM-resident.
# ---------------------------------------------------------------------------
def _mlp_kernel(x_ref, w1_ref, b1_ref, w2_ref, b2_ref, w3_ref, b3_ref,
                w4_ref, b4_ref, out_ref):
    f32 = jnp.float32
    bf16 = jnp.bfloat16

    x = x_ref[...].astype(bf16)

    h = jnp.dot(x, w1_ref[...], preferred_element_type=f32) + b1_ref[...]
    h = jnp.maximum(h.astype(bf16), 0)        # bf16 ReLU epilogue (== ReLU-then-cast)

    h = jnp.dot(h, w2_ref[...], preferred_element_type=f32) + b2_ref[...]
    h = jnp.maximum(h.astype(bf16), 0)

    h = jnp.dot(h, w3_ref[...], preferred_element_type=f32) + b3_ref[...]
    h = jnp.maximum(h.astype(bf16), 0)

    out = jnp.dot(h, w4_ref[...], preferred_element_type=f32) + b4_ref[...]
    out_ref[...] = out.astype(out_ref.dtype)


# ---------------------------------------------------------------------------
# One-time parameter preparation (hoisted out of the per-call forward path):
# lane-align hidden 500 -> 512 and out_dim -> 128 with zero columns (exact on
# the real columns through the ReLU chain) and cast weights to bf16.
# ---------------------------------------------------------------------------
def prepare_params(params):
    (w1, b1), (w2, b2), (w3, b3), (w4, b4) = params
    D = w1.shape[0]
    hidden = w1.shape[1]
    out_dim = w4.shape[1]
    HP = _round_up(hidden, 128)
    OP = _round_up(out_dim, 128)

    def pad2(a, rows, cols):
        return jnp.pad(a, ((0, rows - a.shape[0]), (0, cols - a.shape[1])))

    w1p = pad2(w1, D, HP).astype(jnp.bfloat16)
    w2p = pad2(w2, HP, HP).astype(jnp.bfloat16)
    w3p = pad2(w3, HP, HP).astype(jnp.bfloat16)
    w4p = pad2(w4, HP, OP).astype(jnp.bfloat16)
    b1p = pad2(b1, 1, HP)                          # biases stay f32
    b2p = pad2(b2, 1, HP)
    b3p = pad2(b3, 1, HP)
    b4p = pad2(b4, 1, OP)

    return (w1p, b1p, w2p, b2p, w3p, b3p, w4p, b4p), out_dim


# ---------------------------------------------------------------------------
# VMEM budgeting / batch-tile selection.
# ---------------------------------------------------------------------------
def _vmem_budget_bytes() -> int:
    try:
        cap = int(pltpu.get_tpu_info().vmem_capacity_bytes)
    except Exception:
        cap = 64 * 1024 * 1024       # conservative: v7x per-TensorCore VMEM
    # ~54 MiB on 64-MiB parts (v7x), capped at 100 MiB on 128-MiB parts (v5e/v6e).
    return min(int(cap * 0.85), 100 * 1024 * 1024)


def _vmem_footprint_bytes(tb, D, HP, OP) -> int:
    weights = 2 * 2 * (D * HP + 2 * HP * HP + HP * OP)   # bf16, double-buffered
    biases = 2 * 4 * (3 * HP + OP)                       # f32, double-buffered
    x_io = 2 * tb * D * 4                                # f32 x, double-buffered
    out_io = 2 * tb * OP * 4                             # f32 out, double-buffered
    interm = 4 * tb * HP * 4                             # live hiddens + headroom
    return weights + biases + x_io + out_io + interm


def _pick_batch_tile(B, D, HP, OP, budget) -> int:
    if B <= 8:
        return B                      # single block == full batch dim (allowed)
    tb = 1024
    while tb > 8 and _vmem_footprint_bytes(tb, D, HP, OP) > budget:
        tb //= 2
    # Keep >= 2 grid steps whenever B spans more than one tile, so the
    # "parallel" batch axis can be split across v7x's two TensorCores.
    tb = min(tb, _round_up(-(-B // 2), 8))
    return max(tb, 8)


# ---------------------------------------------------------------------------
# Forward pass on prepared (padded, bf16) parameters.
# ---------------------------------------------------------------------------
def oates_mlp_forward(x, prepared):
    """x: (B, in_dim, sample_size) float32. Returns (B, out_dim) float32."""
    (w1p, b1p, w2p, b2p, w3p, b3p, w4p, b4p), out_dim = prepared

    B = x.shape[0]
    x_flat = x.reshape(B, -1)                      # nn.Flatten()
    D = x_flat.shape[1]
    assert D == w1p.shape[0], (D, w1p.shape)
    HP = w2p.shape[0]
    OP = w4p.shape[1]

    budget = _vmem_budget_bytes()
    TB = _pick_batch_tile(B, D, HP, OP, budget)
    grid = (pl.cdiv(B, TB),)                       # ragged last tile handled by Pallas

    const2 = lambda i: (0, 0)   # weights / biases: single block, VMEM-resident

    flops = 2 * B * (D * HP + 2 * HP * HP + HP * OP)
    bytes_accessed = (B * D * 4                                   # x
                      + (D * HP + 2 * HP * HP + HP * OP) * 2      # bf16 weights
                      + (3 * HP + OP) * 4                         # f32 biases
                      + B * OP * 4)                               # output

    out_pad = pl.pallas_call(
        _mlp_kernel,
        out_shape=jax.ShapeDtypeStruct((B, OP), jnp.float32),
        grid=grid,
        in_specs=[
            pl.BlockSpec((TB, D), lambda i: (i, 0)),   # x: tiled over batch
            pl.BlockSpec((D, HP), const2),             # w1
            pl.BlockSpec((1, HP), const2),             # b1
            pl.BlockSpec((HP, HP), const2),            # w2
            pl.BlockSpec((1, HP), const2),             # b2
            pl.BlockSpec((HP, HP), const2),            # w3
            pl.BlockSpec((1, HP), const2),             # b3
            pl.BlockSpec((HP, OP), const2),            # w4
            pl.BlockSpec((1, OP), const2),             # b4
        ],
        out_specs=pl.BlockSpec((TB, OP), lambda i: (i, 0)),
        compiler_params=pltpu.CompilerParams(
            dimension_semantics=("parallel",),         # shard batch across TCs
            vmem_limit_bytes=int(budget)),
        cost_estimate=pl.CostEstimate(
            flops=int(flops), transcendentals=0,
            bytes_accessed=int(bytes_accessed)),
    )(x_flat, w1p, b1p, w2p, b2p, w3p, b3p, w4p, b4p)

    return out_pad[:, :out_dim]


def oates_mlp_regressor(x, params):
    """Convenience wrapper: pads/casts params every call. Prefer prepare_params()
    once + oates_mlp_forward() for repeated inference."""
    return oates_mlp_forward(x, prepare_params(params))


# ---------------------------------------------------------------------------
# Init + pure-JAX reference.
# ---------------------------------------------------------------------------
def init_params(key, in_dim, sample_size, out_dim=1, hidden=500):
    """Deterministic init mimicking PyTorch Linear default (U[-1/sqrt(in), 1/sqrt(in)]).

    Weights are stored as (in_features, out_features). Biases as (1, out_features).
    Shapes are the true PyTorch shapes (500-wide); lane padding happens in
    prepare_params().
    """
    d_in = in_dim * sample_size
    dims = [(d_in, hidden), (hidden, hidden), (hidden, hidden), (hidden, out_dim)]
    params = []
    for (fan_in, fan_out) in dims:
        key, kw, kb = jax.random.split(key, 3)
        bound = 1.0 / (fan_in ** 0.5)
        w = jax.random.uniform(kw, (fan_in, fan_out), jnp.float32, -bound, bound)
        b = jax.random.uniform(kb, (1, fan_out), jnp.float32, -bound, bound)
        params.append((w, b))
    return params


def reference_forward(x, params):
    """Pure-JAX reference applying the same bf16-weight quantization as the kernel."""
    h = x.reshape(x.shape[0], -1)
    (w1, b1), (w2, b2), (w3, b3), (w4, b4) = params

    def lin(a, w, b):
        return jnp.dot(a.astype(jnp.bfloat16), w.astype(jnp.bfloat16),
                       preferred_element_type=jnp.float32) + b

    h = jnp.maximum(lin(h, w1, b1), 0.0)
    h = jnp.maximum(lin(h, w2, b2), 0.0)
    h = jnp.maximum(lin(h, w3, b3), 0.0)
    return lin(h, w4, b4)


if __name__ == "__main__":
    # Small, module-consistent shapes: batch=2, in_dim=4, sample_size=8 -> flat dim 32.
    B, IN_DIM, SAMPLE_SIZE, OUT_DIM = 2, 4, 8, 1

    key = jax.random.PRNGKey(0)
    kx, kp = jax.random.split(key)
    x = jax.random.normal(kx, (B, IN_DIM, SAMPLE_SIZE), jnp.float32)
    params = init_params(kp, IN_DIM, SAMPLE_SIZE, OUT_DIM)

    prepared = prepare_params(params)            # one-time pad + bf16 cast

    out = jax.block_until_ready(oates_mlp_forward(x, prepared))
    ref = jax.block_until_ready(reference_forward(x, params))
    assert out.shape == (B, OUT_DIM), out.shape
    assert jnp.allclose(out, ref, atol=2e-3, rtol=2e-3), (out, ref)

    # Second check: multi-tile grid with a ragged (non-divisible) batch to
    # exercise the no-pad tail handling (B=20 -> TB=16, 2 grid steps).
    B2 = 20
    x2 = jax.random.normal(jax.random.PRNGKey(1), (B2, IN_DIM, SAMPLE_SIZE), jnp.float32)
    out2 = jax.block_until_ready(oates_mlp_forward(x2, prepared))
    ref2 = jax.block_until_ready(reference_forward(x2, params))
    assert out2.shape == (B2, OUT_DIM), out2.shape
    assert jnp.allclose(out2, ref2, atol=2e-3, rtol=2e-3), (out2, ref2)

    print("KERNEL_OK")
</pallas_src>

<mosaic_0001>
module attributes {stable_mosaic.version = 11 : i64} {
  func.func @_mlp_kernel(%arg0: i32, %arg1: memref<2x32xf32, #tpu.memory_space<vmem>>, %arg2: memref<32x512xbf16, #tpu.memory_space<vmem>>, %arg3: memref<1x512xf32, #tpu.memory_space<vmem>>, %arg4: memref<512x512xbf16, #tpu.memory_space<vmem>>, %arg5: memref<1x512xf32, #tpu.memory_space<vmem>>, %arg6: memref<512x512xbf16, #tpu.memory_space<vmem>>, %arg7: memref<1x512xf32, #tpu.memory_space<vmem>>, %arg8: memref<512x128xbf16, #tpu.memory_space<vmem>>, %arg9: memref<1x128xf32, #tpu.memory_space<vmem>>, %arg10: memref<2x128xf32, #tpu.memory_space<vmem>>) attributes {dimension_semantics = [#tpu.dimension_semantics<parallel>], iteration_bounds = array<i64: 1>, scalar_prefetch = 0 : i64, scratch_operands = 0 : i64, tpu.core_type = #tpu.core_type<tc>, window_params = [{transform_indices = @transform_0, window_bounds = array<i64: 2, 32>}, {pipeline_mode = #tpu.pipeline_mode<synchronous>, transform_indices = @transform_1, window_bounds = array<i64: 32, 512>}, {pipeline_mode = #tpu.pipeline_mode<synchronous>, transform_indices = @transform_2, window_bounds = array<i64: 1, 512>}, {pipeline_mode = #tpu.pipeline_mode<synchronous>, transform_indices = @transform_3, window_bounds = array<i64: 512, 512>}, {pipeline_mode = #tpu.pipeline_mode<synchronous>, transform_indices = @transform_4, window_bounds = array<i64: 1, 512>}, {pipeline_mode = #tpu.pipeline_mode<synchronous>, transform_indices = @transform_5, window_bounds = array<i64: 512, 512>}, {pipeline_mode = #tpu.pipeline_mode<synchronous>, transform_indices = @transform_6, window_bounds = array<i64: 1, 512>}, {pipeline_mode = #tpu.pipeline_mode<synchronous>, transform_indices = @transform_7, window_bounds = array<i64: 512, 128>}, {pipeline_mode = #tpu.pipeline_mode<synchronous>, transform_indices = @transform_8, window_bounds = array<i64: 1, 128>}, {transform_indices = @transform_9, window_bounds = array<i64: 2, 128>}]} {
    %c0 = arith.constant 0 : index
    %c0_0 = arith.constant 0 : index
    %0 = vector.load %arg1[%c0, %c0_0] : memref<2x32xf32, #tpu.memory_space<vmem>>, vector<2x32xf32>
    %1 = arith.truncf %0 : vector<2x32xf32> to vector<2x32xbf16>
    %c0_1 = arith.constant 0 : index
    %c0_2 = arith.constant 0 : index
    %2 = vector.load %arg2[%c0_1, %c0_2] : memref<32x512xbf16, #tpu.memory_space<vmem>>, vector<32x512xbf16>
    %cst = arith.constant dense<0.000000e+00> : vector<2x512xf32>
    %3 = tpu.matmul %1, %2, %cst {dimension_numbers = #tpu.dot_dimension_numbers<[1], [0], [0], [1], [0, 0, 1, 1], [], []>} : vector<2x32xbf16>, vector<32x512xbf16>, vector<2x512xf32> -> vector<2x512xf32>
    %c0_3 = arith.constant 0 : index
    %c0_4 = arith.constant 0 : index
    %4 = vector.load %arg3[%c0_3, %c0_4] : memref<1x512xf32, #tpu.memory_space<vmem>>, vector<1x512xf32>
    %5 = vector.broadcast %4 : vector<1x512xf32> to vector<2x512xf32>
    %6 = arith.addf %3, %5 : vector<2x512xf32>
    %7 = arith.truncf %6 : vector<2x512xf32> to vector<2x512xbf16>
    %cst_5 = arith.constant 0.000000e+00 : bf16
    %8 = vector.broadcast %cst_5 : bf16 to vector<2x512xbf16>
    %9 = arith.maximumf %7, %8 : vector<2x512xbf16>
    %c0_6 = arith.constant 0 : index
    %c0_7 = arith.constant 0 : index
    %10 = vector.load %arg4[%c0_6, %c0_7] : memref<512x512xbf16, #tpu.memory_space<vmem>>, vector<512x512xbf16>
    %cst_8 = arith.constant dense<0.000000e+00> : vector<2x512xf32>
    %11 = tpu.matmul %9, %10, %cst_8 {dimension_numbers = #tpu.dot_dimension_numbers<[1], [0], [0], [1], [0, 0, 1, 1], [], []>} : vector<2x512xbf16>, vector<512x512xbf16>, vector<2x512xf32> -> vector<2x512xf32>
    %c0_9 = arith.constant 0 : index
    %c0_10 = arith.constant 0 : index
    %12 = vector.load %arg5[%c0_9, %c0_10] : memref<1x512xf32, #tpu.memory_space<vmem>>, vector<1x512xf32>
    %13 = vector.broadcast %12 : vector<1x512xf32> to vector<2x512xf32>
    %14 = arith.addf %11, %13 : vector<2x512xf32>
    %15 = arith.truncf %14 : vector<2x512xf32> to vector<2x512xbf16>
    %cst_11 = arith.constant 0.000000e+00 : bf16
    %16 = vector.broadcast %cst_11 : bf16 to vector<2x512xbf16>
    %17 = arith.maximumf %15, %16 : vector<2x512xbf16>
    %c0_12 = arith.constant 0 : index
    %c0_13 = arith.constant 0 : index
    %18 = vector.load %arg6[%c0_12, %c0_13] : memref<512x512xbf16, #tpu.memory_space<vmem>>, vector<512x512xbf16>
    %cst_14 = arith.constant dense<0.000000e+00> : vector<2x512xf32>
    %19 = tpu.matmul %17, %18, %cst_14 {dimension_numbers = #tpu.dot_dimension_numbers<[1], [0], [0], [1], [0, 0, 1, 1], [], []>} : vector<2x512xbf16>, vector<512x512xbf16>, vector<2x512xf32> -> vector<2x512xf32>
    %c0_15 = arith.constant 0 : index
    %c0_16 = arith.constant 0 : index
    %20 = vector.load %arg7[%c0_15, %c0_16] : memref<1x512xf32, #tpu.memory_space<vmem>>, vector<1x512xf32>
    %21 = vector.broadcast %20 : vector<1x512xf32> to vector<2x512xf32>
    %22 = arith.addf %19, %21 : vector<2x512xf32>
    %23 = arith.truncf %22 : vector<2x512xf32> to vector<2x512xbf16>
    %cst_17 = arith.constant 0.000000e+00 : bf16
    %24 = vector.broadcast %cst_17 : bf16 to vector<2x512xbf16>
    %25 = arith.maximumf %23, %24 : vector<2x512xbf16>
    %c0_18 = arith.constant 0 : index
    %c0_19 = arith.constant 0 : index
    %26 = vector.load %arg8[%c0_18, %c0_19] : memref<512x128xbf16, #tpu.memory_space<vmem>>, vector<512x128xbf16>
    %cst_20 = arith.constant dense<0.000000e+00> : vector<2x128xf32>
    %27 = tpu.matmul %25, %26, %cst_20 {dimension_numbers = #tpu.dot_dimension_numbers<[1], [0], [0], [1], [0, 0, 1, 1], [], []>} : vector<2x512xbf16>, vector<512x128xbf16>, vector<2x128xf32> -> vector<2x128xf32>
    %c0_21 = arith.constant 0 : index
    %c0_22 = arith.constant 0 : index
    %28 = vector.load %arg9[%c0_21, %c0_22] : memref<1x128xf32, #tpu.memory_space<vmem>>, vector<1x128xf32>
    %29 = vector.broadcast %28 : vector<1x128xf32> to vector<2x128xf32>
    %30 = arith.addf %27, %29 : vector<2x128xf32>
    %c0_23 = arith.constant 0 : index
    %c0_24 = arith.constant 0 : index
    %31 = vector.load %arg10[%c0_23, %c0_24] : memref<2x128xf32, #tpu.memory_space<vmem>>, vector<2x128xf32>
    tpu.vector_store %arg10[%c0_23, %c0_24], %30 {strides = array<i32>} : memref<2x128xf32, #tpu.memory_space<vmem>>, vector<2x128xf32>,
    return
  }
  func.func @transform_0(%arg0: i32) -> (i32, i32) {
    %c0_i32 = arith.constant 0 : i32
    %c0_i32_0 = arith.constant 0 : i32
    return %arg0, %c0_i32 : i32, i32
  }
  func.func @transform_1(%arg0: i32) -> (i32, i32) {
    %c0_i32 = arith.constant 0 : i32
    %c0_i32_0 = arith.constant 0 : i32
    %c0_i32_1 = arith.constant 0 : i32
    return %c0_i32, %c0_i32_0 : i32, i32
  }
  func.func @transform_2(%arg0: i32) -> (i32, i32) {
    %c0_i32 = arith.constant 0 : i32
    %c0_i32_0 = arith.constant 0 : i32
    %c0_i32_1 = arith.constant 0 : i32
    return %c0_i32, %c0_i32_0 : i32, i32
  }
  func.func @transform_3(%arg0: i32) -> (i32, i32) {
    %c0_i32 = arith.constant 0 : i32
    %c0_i32_0 = arith.constant 0 : i32
    %c0_i32_1 = arith.constant 0 : i32
    return %c0_i32, %c0_i32_0 : i32, i32
  }
  func.func @transform_4(%arg0: i32) -> (i32, i32) {
    %c0_i32 = arith.constant 0 : i32
    %c0_i32_0 = arith.constant 0 : i32
    %c0_i32_1 = arith.constant 0 : i32
    return %c0_i32, %c0_i32_0 : i32, i32
  }
  func.func @transform_5(%arg0: i32) -> (i32, i32) {
    %c0_i32 = arith.constant 0 : i32
    %c0_i32_0 = arith.constant 0 : i32
    %c0_i32_1 = arith.constant 0 : i32
    return %c0_i32, %c0_i32_0 : i32, i32
  }
  func.func @transform_6(%arg0: i32) -> (i32, i32) {
    %c0_i32 = arith.constant 0 : i32
    %c0_i32_0 = arith.constant 0 : i32
    %c0_i32_1 = arith.constant 0 : i32
    return %c0_i32, %c0_i32_0 : i32, i32
  }
  func.func @transform_7(%arg0: i32) -> (i32, i32) {
    %c0_i32 = arith.constant 0 : i32
    %c0_i32_0 = arith.constant 0 : i32
    %c0_i32_1 = arith.constant 0 : i32
    return %c0_i32, %c0_i32_0 : i32, i32
  }
  func.func @transform_8(%arg0: i32) -> (i32, i32) {
    %c0_i32 = arith.constant 0 : i32
    %c0_i32_0 = arith.constant 0 : i32
    %c0_i32_1 = arith.constant 0 : i32
    return %c0_i32, %c0_i32_0 : i32, i32
  }
  func.func @transform_9(%arg0: i32) -> (i32, i32) {
    %c0_i32 = arith.constant 0 : i32
    %c0_i32_0 = arith.constant 0 : i32
    return %arg0, %c0_i32 : i32, i32
  }
}

</mosaic_0001>

<llo_original>
// kernel: tpu_custom_call.1
$region0: #{tpu_custom_call.1}
  #allocation0 [shape = 'u32[]', space=smem, size = 0x4, offset = 0x4, fixed_abs, tag = 'smem constant byte address 0x4 - core index']
  #allocation1 [shape = 'u32[72,128]{1,0:T(1,128)}', space=vmem, size = 0x9000, scoped, tag = 'internal scratch']
  %s0 = inlined_call_operand.hbm [shape: f32[2,32], index: 0, kind: input, shape index: {}]
  %s1 = inlined_call_operand.hbm [shape: bf16[32,512], index: 1, kind: input, shape index: {}]
  %s2 = inlined_call_operand.hbm [shape: f32[1,512], index: 2, kind: input, shape index: {}]
  %s3 = inlined_call_operand.hbm [shape: bf16[512,512], index: 3, kind: input, shape index: {}]
  %s4 = inlined_call_operand.hbm [shape: f32[1,512], index: 4, kind: input, shape index: {}]
  %s5 = inlined_call_operand.hbm [shape: bf16[512,512], index: 5, kind: input, shape index: {}]
  %s6 = inlined_call_operand.vmem [shape: f32[1,512], index: 6, kind: input, shape index: {}]
  %s7 = inlined_call_operand.hbm [shape: bf16[512,128], index: 7, kind: input, shape index: {}]
  %s8 = inlined_call_operand.vmem [shape: f32[1,128], index: 8, kind: input, shape index: {}]
  %s9 = inlined_call_operand.hbm [shape: f32[2,128], index: 9, kind: output, shape index: {}]
  %s10 = sld [smem:[#allocation0]]
  $region74: #{tpu_custom_call.1} parent=0
    _
  %s12 = ssub.s32 1, %s10
  %s13 = scalar_select 0, %s12, %s10
  $region1: #{tpu_custom_call.1} parent=0
    #allocation2 [shape = 'u8[1024]{0}', space=vmem, size = 0x400, scoped, tag = 'input window, operand 0, single buffered']
    #allocation3 [shape = 's32[1]{0}', space=sflag, size = 0x4, scoped, tag = 'scoped memory for tpu_custom_call.1']
    #allocation4 [shape = 's32[1]{0}', space=sflag, size = 0x4, scoped, tag = 'scoped memory for tpu_custom_call.1']
    #allocation5 [shape = 'u8[32768]{0}', space=vmem, size = 0x8000, scoped, tag = 'input window, operand 1, single buffered']
    #allocation6 [shape = 's32[1]{0}', space=sflag, size = 0x4, scoped, tag = 'scoped memory for tpu_custom_call.1']
    #allocation7 [shape = 'u8[2048]{0}', space=vmem, size = 0x800, scoped, tag = 'input window, operand 2, single buffered']
    #allocation8 [shape = 'u8[524288]{0}', space=vmem, size = 0x80000, scoped, tag = 'input window, operand 3, single buffered']
    #allocation9 [shape = 's32[1]{0}', space=sflag, size = 0x4, scoped, tag = 'scoped memory for tpu_custom_call.1']
    #allocation10 [shape = 'u8[2048]{0}', space=vmem, size = 0x800, scoped, tag = 'input window, operand 4, single buffered']
    #allocation11 [shape = 'u8[524288]{0}', space=vmem, size = 0x80000, scoped, tag = 'input window, operand 5, single buffered']
    #allocation12 [shape = 's32[1]{0}', space=sflag, size = 0x4, scoped, tag = 'scoped memory for tpu_custom_call.1']
    #allocation13 [shape = 'u8[131072]{0}', space=vmem, size = 0x20000, scoped, tag = 'input window, operand 7, single buffered']
    #allocation14 [shape = 'u8[1024]{0}', space=vmem, size = 0x400, scoped, tag = 'output window, operand 0, single buffered']
    %14 = vsyncpa [#allocation3], 0
    %15 = vsyncpa [#allocation6], 0
    %16 = vsyncpa [#allocation9], 0
    %17 = vsyncpa [#allocation12], 0
    %18 = vsyncpa [#allocation4], 0
    // Predicated region
    $region2: #{tpu_custom_call.1} parent=1 // pred_check
      _
    $region3: #{tpu_custom_call.1} parent=1 // pred_check_branch
      %20 = sbr.rel (0) target = $region5
    $region4: #{tpu_custom_call.1} parent=1 // pred_region
      %22 = vsyncadd [#allocation3], 0
      %s24 = sshll.u32 %s0, 4
      %s25 = int_to_ptr.hbm [resolvable:$true] %s24
      %s26 = sshll.u32 [#allocation2], 4
      %s27 = int_to_ptr.vmem [resolvable:$true] %s26
      %29 = dma.hbm_to_vmem [thread:$0]  %s25, 32, %s27, [#allocation3]
    $region5: #{tpu_custom_call.1} parent=1 // pred_fallthru
      _
    // Predicated region
    $region6: #{tpu_custom_call.1} parent=1 // pred_check
      _
    $region7: #{tpu_custom_call.1} parent=1 // pred_check_branch
      %31 = sbr.rel (0) target = $region9
    $region8: #{tpu_custom_call.1} parent=1 // pred_region
      %33 = vsyncadd [#allocation6], 0
      %s34 = sshll.u32 %s1, 4
      %s35 = int_to_ptr.hbm [resolvable:$true] %s34
      %s36 = sshll.u32 [#allocation5], 4
      %s37 = int_to_ptr.vmem [resolvable:$true] %s36
      %42 = dma.hbm_to_vmem [thread:$0]  %s35, 1024, %s37, [#allocation6], 256, 256, 16
    $region9: #{tpu_custom_call.1} parent=1 // pred_fallthru
      _
    // Predicated region
    $region10: #{tpu_custom_call.1} parent=1 // pred_check
      _
    $region11: #{tpu_custom_call.1} parent=1 // pred_check_branch
      %44 = sbr.rel (0) target = $region13
    $region12: #{tpu_custom_call.1} parent=1 // pred_region
      %46 = vsyncadd [#allocation6], 0
      %s48 = sshll.u32 %s2, 4
      %s49 = int_to_ptr.hbm [resolvable:$true] %s48
      %s50 = sshll.u32 [#allocation7], 4
      %s51 = int_to_ptr.vmem [resolvable:$true] %s50
      %53 = dma.hbm_to_vmem [thread:$0]  %s49, 64, %s51, [#allocation6]
    $region13: #{tpu_custom_call.1} parent=1 // pred_fallthru
      _
    // Predicated region
    $region14: #{tpu_custom_call.1} parent=1 // pred_check
      _
    $region15: #{tpu_custom_call.1} parent=1 // pred_check_branch
      %55 = sbr.rel (0) target = $region17
    $region16: #{tpu_custom_call.1} parent=1 // pred_region
      %57 = vsyncadd [#allocation9], 0
      %s58 = sshll.u32 %s3, 4
      %s59 = int_to_ptr.hbm [resolvable:$true] %s58
      %s60 = sshll.u32 [#allocation8], 4
      %s61 = int_to_ptr.vmem [resolvable:$true] %s60
      %66 = dma.hbm_to_vmem [thread:$0]  %s59, 16384, %s61, [#allocation9], 256, 256, 16
    $region17: #{tpu_custom_call.1} parent=1 // pred_fallthru
      _
    // Predicated region
    $region18: #{tpu_custom_call.1} parent=1 // pred_check
      _
    $region19: #{tpu_custom_call.1} parent=1 // pred_check_branch
      %68 = sbr.rel (0) target = $region21
    $region20: #{tpu_custom_call.1} parent=1 // pred_region
      %70 = vsyncadd [#allocation9], 0
      %s72 = sshll.u32 %s4, 4
      %s73 = int_to_ptr.hbm [resolvable:$true] %s72
      %s74 = sshll.u32 [#allocation10], 4
      %s75 = int_to_ptr.vmem [resolvable:$true] %s74
      %77 = dma.hbm_to_vmem [thread:$0]  %s73, 64, %s75, [#allocation9]
    $region21: #{tpu_custom_call.1} parent=1 // pred_fallthru
      _
    // Predicated region
    $region22: #{tpu_custom_call.1} parent=1 // pred_check
      _
    $region23: #{tpu_custom_call.1} parent=1 // pred_check_branch
      %79 = sbr.rel (0) target = $region25
    $region24: #{tpu_custom_call.1} parent=1 // pred_region
      %81 = vsyncadd [#allocation12], 0
      %s82 = sshll.u32 %s5, 4
      %s83 = int_to_ptr.hbm [resolvable:$true] %s82
      %s84 = sshll.u32 [#allocation11], 4
      %s85 = int_to_ptr.vmem [resolvable:$true] %s84
      %90 = dma.hbm_to_vmem [thread:$0]  %s83, 16384, %s85, [#allocation12], 256, 256, 16
    $region25: #{tpu_custom_call.1} parent=1 // pred_fallthru
      _
    // Predicated region
    $region26: #{tpu_custom_call.1} parent=1 // pred_check
      _
    $region27: #{tpu_custom_call.1} parent=1 // pred_check_branch
      %92 = sbr.rel (0) target = $region29
    $region28: #{tpu_custom_call.1} parent=1 // pred_region
      _
    $region29: #{tpu_custom_call.1} parent=1 // pred_fallthru
      _
    // Predicated region
    $region30: #{tpu_custom_call.1} parent=1 // pred_check
      _
    $region31: #{tpu_custom_call.1} parent=1 // pred_check_branch
      %94 = sbr.rel (0) target = $region33
    $region32: #{tpu_custom_call.1} parent=1 // pred_region
      %96 = vsyncadd [#allocation12], 0
      %s97 = sshll.u32 %s7, 4
      %s98 = int_to_ptr.hbm [resolvable:$true] %s97
      %s99 = sshll.u32 [#allocation13], 4
      %s100 = int_to_ptr.vmem [resolvable:$true] %s99
      %105 = dma.hbm_to_vmem [thread:$0]  %s98, 4096, %s100, [#allocation12], 64, 64, 4
    $region33: #{tpu_custom_call.1} parent=1 // pred_fallthru
      _
    // Predicated region
    $region34: #{tpu_custom_call.1} parent=1 // pred_check
      _
    $region35: #{tpu_custom_call.1} parent=1 // pred_check_branch
      %107 = sbr.rel (0) target = $region37
    $region36: #{tpu_custom_call.1} parent=1 // pred_region
      _
    $region37: #{tpu_custom_call.1} parent=1 // pred_fallthru
      _
    // Predicated region
    $region38: #{tpu_custom_call.1} parent=1 // pred_check
      _
    $region39: #{tpu_custom_call.1} parent=1 // pred_check_branch
      %109 = sbr.rel (0) target = $region41
    $region40: #{tpu_custom_call.1} parent=1 // pred_region
      %111 = dma.done [#allocation3], 32
    $region41: #{tpu_custom_call.1} parent=1 // pred_fallthru
      _
    // Predicated region
    $region42: #{tpu_custom_call.1} parent=1 // pred_check
      _
    $region43: #{tpu_custom_call.1} parent=1 // pred_check_branch
      %113 = sbr.rel (0) target = $region45
    $region44: #{tpu_custom_call.1} parent=1 // pred_region
      %115 = dma.done [#allocation6], 1024
    $region45: #{tpu_custom_call.1} parent=1 // pred_fallthru
      _
    // Predicated region
    $region46: #{tpu_custom_call.1} parent=1 // pred_check
      _
    $region47: #{tpu_custom_call.1} parent=1 // pred_check_branch
      %117 = sbr.rel (0) target = $region49
    $region48: #{tpu_custom_call.1} parent=1 // pred_region
      %119 = dma.done [#allocation6], 64
    $region49: #{tpu_custom_call.1} parent=1 // pred_fallthru
      _
    // Predicated region
    $region50: #{tpu_custom_call.1} parent=1 // pred_check
      _
    $region51: #{tpu_custom_call.1} parent=1 // pred_check_branch
      %121 = sbr.rel (0) target = $region53
    $region52: #{tpu_custom_call.1} parent=1 // pred_region
      %123 = dma.done [#allocation9], 16384
    $region53: #{tpu_custom_call.1} parent=1 // pred_fallthru
      _
    // Predicated region
    $region54: #{tpu_custom_call.1} parent=1 // pred_check
      _
    $region55: #{tpu_custom_call.1} parent=1 // pred_check_branch
      %125 = sbr.rel (0) target = $region57
    $region56: #{tpu_custom_call.1} parent=1 // pred_region
      %127 = dma.done [#allocation9], 64
    $region57: #{tpu_custom_call.1} parent=1 // pred_fallthru
      _
    // Predicated region
    $region58: #{tpu_custom_call.1} parent=1 // pred_check
      _
    $region59: #{tpu_custom_call.1} parent=1 // pred_check_branch
      %129 = sbr.rel (0) target = $region61
    $region60: #{tpu_custom_call.1} parent=1 // pred_region
      %131 = dma.done [#allocation12], 16384
    $region61: #{tpu_custom_call.1} parent=1 // pred_fallthru
      _
    // Predicated region
    $region62: #{tpu_custom_call.1} parent=1 // pred_check
      _
    $region63: #{tpu_custom_call.1} parent=1 // pred_check_branch
      %133 = sbr.rel (0) target = $region65
    $region64: #{tpu_custom_call.1} parent=1 // pred_region
      %135 = dma.done [#allocation12], 4096
    $region65: #{tpu_custom_call.1} parent=1 // pred_fallthru
      _
    %v137 = vld [vmem:[#allocation2] sm:$0x3]
    %v138 = vpack.c.bf16 %v137, %v137
    %v139 = vld [vmem:[#allocation5] sm:$0xff]
    %v140 = vld [vmem:[#allocation5 + $0x8] sm:$0xff]
    %v141 = vld [vmem:[#allocation5 + $0x10] sm:$0xff]
    %v142 = vld [vmem:[#allocation5 + $0x18] sm:$0xff]
    %v143 = vld [vmem:[#allocation5 + $0x20] sm:$0xff]
    %v144 = vld [vmem:[#allocation5 + $0x28] sm:$0xff]
    %v145 = vld [vmem:[#allocation5 + $0x30] sm:$0xff]
    %v146 = vld [vmem:[#allocation5 + $0x38] sm:$0xff]
    %v147 = vld [vmem:[#allocation7] sm:$0xf]
    %v149 = vperm.slane %v147, 0
    %v150 = vperm.slane %v147, 1
    %v151 = vperm.slane %v147, 2
    %v152 = vperm.slane %v147, 3
    %v165 = vunpack.c.l.b16 %v139
    %v166 = vunpack.c.h.b16 %v139
    %v167 = vunpack.c.l.b16 %v140
    %v168 = vunpack.c.h.b16 %v140
    %v169 = vunpack.c.l.b16 %v141
    %v170 = vunpack.c.h.b16 %v141
    %v171 = vunpack.c.l.b16 %v142
    %v172 = vunpack.c.h.b16 %v142
    %v173 = vunpack.c.l.b16 %v143
    %v174 = vunpack.c.h.b16 %v143
    %v175 = vunpack.c.l.b16 %v144
    %v176 = vunpack.c.h.b16 %v144
    %v177 = vunpack.c.l.b16 %v145
    %v178 = vunpack.c.h.b16 %v145
    %v179 = vunpack.c.l.b16 %v146
    %v180 = vunpack.c.h.b16 %v146
    %v181 = vpack.c.b16 %v169, %v165
    %v182 = vpack.c.b16 %v170, %v166
    %v183 = vpack.c.b16 %v171, %v167
    %v184 = vpack.c.b16 %v172, %v168
    %v185 = vpack.c.b16 %v177, %v173
    %v186 = vpack.c.b16 %v178, %v174
    %v187 = vpack.c.b16 %v179, %v175
    %v188 = vpack.c.b16 %v180, %v176
    %vm197 = vcmask 261120
    %v199 = vsel %vm197, %v138, 0
    %201 = vmatpush.bf16.msra.mxu0 0
    %202 = vmatpush.bf16.msra.mxu0 0
    %203 = vmatpush.bf16.msra.mxu0 0
    %204 = vmatpush.bf16.msra.mxu0 0
    %205 = vmatpush.bf16.msra.mxu0 0
    %206 = vmatpush.bf16.msra.mxu0 0
    %207 = vmatpush.bf16.msra.mxu0 %v185
    %208 = vmatpush.bf16.msra.mxu0 %v181
    %209 = vmatmul.bf16.gmra.mxu0 %v199
    %v210 = vpop.f32.mrf.mxu0
    %v211 = vadd.f32 %v149, %v210
    %v212 = vpop.f32.mrf.mxu0
    %213 = vdwg.mxu0
    %214 = vmatpush.bf16.msra.mxu0 0
    %215 = vmatpush.bf16.msra.mxu0 0
    %216 = vmatpush.bf16.msra.mxu0 0
    %217 = vmatpush.bf16.msra.mxu0 0
    %218 = vmatpush.bf16.msra.mxu0 0
    %219 = vmatpush.bf16.msra.mxu0 0
    %220 = vmatpush.bf16.msra.mxu0 %v186
    %221 = vmatpush.bf16.msra.mxu0 %v182
    %222 = vmatmul.bf16.gmra.mxu0 %v199
    %v223 = vpop.f32.mrf.mxu0
    %v224 = vadd.f32 %v150, %v223
    %v225 = vpop.f32.mrf.mxu0
    %226 = vdwg.mxu0
    %227 = vmatpush.bf16.msra.mxu0 0
    %228 = vmatpush.bf16.msra.mxu0 0
    %229 = vmatpush.bf16.msra.mxu0 0
    %230 = vmatpush.bf16.msra.mxu0 0
    %231 = vmatpush.bf16.msra.mxu0 0
    %232 = vmatpush.bf16.msra.mxu0 0
    %233 = vmatpush.bf16.msra.mxu0 %v187
    %234 = vmatpush.bf16.msra.mxu0 %v183
    %235 = vmatmul.bf16.gmra.mxu0 %v199
    %v236 = vpop.f32.mrf.mxu0
    %v237 = vadd.f32 %v151, %v236
    %v238 = vpop.f32.mrf.mxu0
    %239 = vdwg.mxu0
    %240 = vmatpush.bf16.msra.mxu0 0
    %241 = vmatpush.bf16.msra.mxu0 0
    %242 = vmatpush.bf16.msra.mxu0 0
    %243 = vmatpush.bf16.msra.mxu0 0
    %244 = vmatpush.bf16.msra.mxu0 0
    %245 = vmatpush.bf16.msra.mxu0 0
    %246 = vmatpush.bf16.msra.mxu0 %v188
    %247 = vmatpush.bf16.msra.mxu0 %v184
    %248 = vmatmul.bf16.gmra.mxu0 %v199
    %v249 = vpop.f32.mrf.mxu0
    %v250 = vadd.f32 %v152, %v249
    %v251 = vpop.f32.mrf.mxu0
    %252 = vdwg.mxu0
    %v253 = vpack.c.bf16 %v224, %v211
    %v254 = vpack.c.bf16 %v250, %v237
    %v255 = vunpack.c.l.bf16 %v253
    %v256 = vunpack.c.h.bf16 %v253
    %v257 = vunpack.c.l.bf16 %v254
    %v258 = vunpack.c.h.bf16 %v254
    %v259 = vmax.f32 %v255, 0.0
    %v260 = vmax.f32 %v256, 0.0
    %v261 = vmax.f32 %v257, 0.0
    %v262 = vmax.f32 %v258, 0.0
    %v263 = vpack.c.bf16 %v259, %v259
    %v264 = vpack.c.bf16 %v260, %v260
    %v265 = vpack.c.bf16 %v261, %v261
    %v266 = vpack.c.bf16 %v262, %v262
    %v267 = vld [vmem:[#allocation8] sm:$0xff]
    %v268 = vld [vmem:[#allocation8 + $0x8] sm:$0xff]
    %v269 = vld [vmem:[#allocation8 + $0x10] sm:$0xff]
    %v270 = vld [vmem:[#allocation8 + $0x18] sm:$0xff]
    %v271 = vld [vmem:[#allocation8 + $0x20] sm:$0xff]
    %v272 = vld [vmem:[#allocation8 + $0x28] sm:$0xff]
    %v273 = vld [vmem:[#allocation8 + $0x30] sm:$0xff]
    %v274 = vld [vmem:[#allocation8 + $0x38] sm:$0xff]
    %v275 = vld [vmem:[#allocation8 + $0x40] sm:$0xff]
    %v276 = vld [vmem:[#allocation8 + $0x48] sm:$0xff]
    %v277 = vld [vmem:[#allocation8 + $0x50] sm:$0xff]
    %v278 = vld [vmem:[#allocation8 + $0x58] sm:$0xff]
    %v279 = vld [vmem:[#allocation8 + $0x60] sm:$0xff]
    %v280 = vld [vmem:[#allocation8 + $0x68] sm:$0xff]
    %v281 = vld [vmem:[#allocation8 + $0x70] sm:$0xff]
    %v282 = vld [vmem:[#allocation8 + $0x78] sm:$0xff]
    %v283 = vld [vmem:[#allocation8 + $0x80] sm:$0xff]
    %v284 = vld [vmem:[#allocation8 + $0x88] sm:$0xff]
    %v285 = vld [vmem:[#allocation8 + $0x90] sm:$0xff]
    %v286 = vld [vmem:[#allocation8 + $0x98] sm:$0xff]
    %v287 = vld [vmem:[#allocation8 + $0xa0] sm:$0xff]
    %v288 = vld [vmem:[#allocation8 + $0xa8] sm:$0xff]
    %v289 = vld [vmem:[#allocation8 + $0xb0] sm:$0xff]
    %v290 = vld [vmem:[#allocation8 + $0xb8] sm:$0xff]
    %v291 = vld [vmem:[#allocation8 + $0xc0] sm:$0xff]
    %v292 = vld [vmem:[#allocation8 + $0xc8] sm:$0xff]
    %v293 = vld [vmem:[#allocation8 + $0xd0] sm:$0xff]
    %v294 = vld [vmem:[#allocation8 + $0xd8] sm:$0xff]
    %v295 = vld [vmem:[#allocation8 + $0xe0] sm:$0xff]
    %v296 = vld [vmem:[#allocation8 + $0xe8] sm:$0xff]
    %v297 = vld [vmem:[#allocation8 + $0xf0] sm:$0xff]
    %v298 = vld [vmem:[#allocation8 + $0xf8] sm:$0xff]
    %v299 = vld [vmem:[#allocation8 + $0x100] sm:$0xff]
    %v300 = vld [vmem:[#allocation8 + $0x108] sm:$0xff]
    %v301 = vld [vmem:[#allocation8 + $0x110] sm:$0xff]
    %v302 = vld [vmem:[#allocation8 + $0x118] sm:$0xff]
    %v303 = vld [vmem:[#allocation8 + $0x120] sm:$0xff]
    %v304 = vld [vmem:[#allocation8 + $0x128] sm:$0xff]
    %v305 = vld [vmem:[#allocation8 + $0x130] sm:$0xff]
    %v306 = vld [vmem:[#allocation8 + $0x138] sm:$0xff]
    %v307 = vld [vmem:[#allocation8 + $0x140] sm:$0xff]
    %v308 = vld [vmem:[#allocation8 + $0x148] sm:$0xff]
    %v309 = vld [vmem:[#allocation8 + $0x150] sm:$0xff]
    %v310 = vld [vmem:[#allocation8 + $0x158] sm:$0xff]
    %v311 = vld [vmem:[#allocation8 + $0x160] sm:$0xff]
    %v312 = vld [vmem:[#allocation8 + $0x168] sm:$0xff]
    %v313 = vld [vmem:[#allocation8 + $0x170] sm:$0xff]
    %v314 = vld [vmem:[#allocation8 + $0x178] sm:$0xff]
    %v315 = vld [vmem:[#allocation8 + $0x180] sm:$0xff]
    %v316 = vld [vmem:[#allocation8 + $0x188] sm:$0xff]
    %v317 = vld [vmem:[#allocation8 + $0x190] sm:$0xff]
    %v318 = vld [vmem:[#allocation8 + $0x198] sm:$0xff]
    %v319 = vld [vmem:[#allocation8 + $0x1a0] sm:$0xff]
    %v320 = vld [vmem:[#allocation8 + $0x1a8] sm:$0xff]
    %v321 = vld [vmem:[#allocation8 + $0x1b0] sm:$0xff]
    %v322 = vld [vmem:[#allocation8 + $0x1b8] sm:$0xff]
    %v323 = vld [vmem:[#allocation8 + $0x1c0] sm:$0xff]
    %v324 = vld [vmem:[#allocation8 + $0x1c8] sm:$0xff]
    %v325 = vld [vmem:[#allocation8 + $0x1d0] sm:$0xff]
    %v326 = vld [vmem:[#allocation8 + $0x1d8] sm:$0xff]
    %v327 = vld [vmem:[#allocation8 + $0x1e0] sm:$0xff]
    %v328 = vld [vmem:[#allocation8 + $0x1e8] sm:$0xff]
    %v329 = vld [vmem:[#allocation8 + $0x1f0] sm:$0xff]
    %v330 = vld [vmem:[#allocation8 + $0x1f8] sm:$0xff]
    %v331 = vld [vmem:[#allocation8 + $0x200] sm:$0xff]
    %v332 = vld [vmem:[#allocation8 + $0x208] sm:$0xff]
    %v333 = vld [vmem:[#allocation8 + $0x210] sm:$0xff]
    %v334 = vld [vmem:[#allocation8 + $0x218] sm:$0xff]
    %v335 = vld [vmem:[#allocation8 + $0x220] sm:$0xff]
    %v336 = vld [vmem:[#allocation8 + $0x228] sm:$0xff]
    %v337 = vld [vmem:[#allocation8 + $0x230] sm:$0xff]
    %v338 = vld [vmem:[#allocation8 + $0x238] sm:$0xff]
    %v339 = vld [vmem:[#allocation8 + $0x240] sm:$0xff]
    %v340 = vld [vmem:[#allocation8 + $0x248] sm:$0xff]
    %v341 = vld [vmem:[#allocation8 + $0x250] sm:$0xff]
    %v342 = vld [vmem:[#allocation8 + $0x258] sm:$0xff]
    %v343 = vld [vmem:[#allocation8 + $0x260] sm:$0xff]
    %v344 = vld [vmem:[#allocation8 + $0x268] sm:$0xff]
    %v345 = vld [vmem:[#allocation8 + $0x270] sm:$0xff]
    %v346 = vld [vmem:[#allocation8 + $0x278] sm:$0xff]
    %v347 = vld [vmem:[#allocation8 + $0x280] sm:$0xff]
    %v348 = vld [vmem:[#allocation8 + $0x288] sm:$0xff]
    %v349 = vld [vmem:[#allocation8 + $0x290] sm:$0xff]
    %v350 = vld [vmem:[#allocation8 + $0x298] sm:$0xff]
    %v351 = vld [vmem:[#allocation8 + $0x2a0] sm:$0xff]
    %v352 = vld [vmem:[#allocation8 + $0x2a8] sm:$0xff]
    %v353 = vld [vmem:[#allocation8 + $0x2b0] sm:$0xff]
    %v354 = vld [vmem:[#allocation8 + $0x2b8] sm:$0xff]
    %v355 = vld [vmem:[#allocation8 + $0x2c0] sm:$0xff]
    %v356 = vld [vmem:[#allocation8 + $0x2c8] sm:$0xff]
    %v357 = vld [vmem:[#allocation8 + $0x2d0] sm:$0xff]
    %v358 = vld [vmem:[#allocation8 + $0x2d8] sm:$0xff]
    %v359 = vld [vmem:[#allocation8 + $0x2e0] sm:$0xff]
    %v360 = vld [vmem:[#allocation8 + $0x2e8] sm:$0xff]
    %v361 = vld [vmem:[#allocation8 + $0x2f0] sm:$0xff]
    %v362 = vld [vmem:[#allocation8 + $0x2f8] sm:$0xff]
    %v363 = vld [vmem:[#allocation8 + $0x300] sm:$0xff]
    %v364 = vld [vmem:[#allocation8 + $0x308] sm:$0xff]
    %v365 = vld [vmem:[#allocation8 + $0x310] sm:$0xff]
    %v366 = vld [vmem:[#allocation8 + $0x318] sm:$0xff]
    %v367 = vld [vmem:[#allocation8 + $0x320] sm:$0xff]
    %v368 = vld [vmem:[#allocation8 + $0x328] sm:$0xff]
    %v369 = vld [vmem:[#allocation8 + $0x330] sm:$0xff]
    %v370 = vld [vmem:[#allocation8 + $0x338] sm:$0xff]
    %v371 = vld [vmem:[#allocation8 + $0x340] sm:$0xff]
    %v372 = vld [vmem:[#allocation8 + $0x348] sm:$0xff]
    %v373 = vld [vmem:[#allocation8 + $0x350] sm:$0xff]
    %v374 = vld [vmem:[#allocation8 + $0x358] sm:$0xff]
    %v375 = vld [vmem:[#allocation8 + $0x360] sm:$0xff]
    %v376 = vld [vmem:[#allocation8 + $0x368] sm:$0xff]
    %v377 = vld [vmem:[#allocation8 + $0x370] sm:$0xff]
    %v378 = vld [vmem:[#allocation8 + $0x378] sm:$0xff]
    %v379 = vld [vmem:[#allocation8 + $0x380] sm:$0xff]
    %v380 = vld [vmem:[#allocation8 + $0x388] sm:$0xff]
    %v381 = vld [vmem:[#allocation8 + $0x390] sm:$0xff]
    %v382 = vld [vmem:[#allocation8 + $0x398] sm:$0xff]
    %v383 = vld [vmem:[#allocation8 + $0x3a0] sm:$0xff]
    %v384 = vld [vmem:[#allocation8 + $0x3a8] sm:$0xff]
    %v385 = vld [vmem:[#allocation8 + $0x3b0] sm:$0xff]
    %v386 = vld [vmem:[#allocation8 + $0x3b8] sm:$0xff]
    %v387 = vld [vmem:[#allocation8 + $0x3c0] sm:$0xff]
    %v388 = vld [vmem:[#allocation8 + $0x3c8] sm:$0xff]
    %v389 = vld [vmem:[#allocation8 + $0x3d0] sm:$0xff]
    %v390 = vld [vmem:[#allocation8 + $0x3d8] sm:$0xff]
    %v391 = vld [vmem:[#allocation8 + $0x3e0] sm:$0xff]
    %v392 = vld [vmem:[#allocation8 + $0x3e8] sm:$0xff]
    %v393 = vld [vmem:[#allocation8 + $0x3f0] sm:$0xff]
    %v394 = vld [vmem:[#allocation8 + $0x3f8] sm:$0xff]
    %v395 = vld [vmem:[#allocation10] sm:$0xf]
    %v397 = vperm.slane %v395, 0
    %v398 = vperm.slane %v395, 1
    %v399 = vperm.slane %v395, 2
    %v400 = vperm.slane %v395, 3
    %v533 = vunpack.c.l.b16 %v267
    %v534 = vunpack.c.h.b16 %v267
    %v535 = vunpack.c.l.b16 %v268
    %v536 = vunpack.c.h.b16 %v268
    %v537 = vunpack.c.l.b16 %v269
    %v538 = vunpack.c.h.b16 %v269
    %v539 = vunpack.c.l.b16 %v270
    %v540 = vunpack.c.h.b16 %v270
    %v541 = vunpack.c.l.b16 %v271
    %v542 = vunpack.c.h.b16 %v271
    %v543 = vunpack.c.l.b16 %v272
    %v544 = vunpack.c.h.b16 %v272
    %v545 = vunpack.c.l.b16 %v273
    %v546 = vunpack.c.h.b16 %v273
    %v547 = vunpack.c.l.b16 %v274
    %v548 = vunpack.c.h.b16 %v274
    %v549 = vunpack.c.l.b16 %v275
    %v550 = vunpack.c.h.b16 %v275
    %v551 = vunpack.c.l.b16 %v276
    %v552 = vunpack.c.h.b16 %v276
    %v553 = vunpack.c.l.b16 %v277
    %v554 = vunpack.c.h.b16 %v277
    %v555 = vunpack.c.l.b16 %v278
    %v556 = vunpack.c.h.b16 %v278
    %v557 = vunpack.c.l.b16 %v279
    %v558 = vunpack.c.h.b16 %v279
    %v559 = vunpack.c.l.b16 %v280
    %v560 = vunpack.c.h.b16 %v280
    %v561 = vunpack.c.l.b16 %v281
    %v562 = vunpack.c.h.b16 %v281
    %v563 = vunpack.c.l.b16 %v282
    %v564 = vunpack.c.h.b16 %v282
    %v565 = vunpack.c.l.b16 %v283
    %v566 = vunpack.c.h.b16 %v283
    %v567 = vunpack.c.l.b16 %v284
    %v568 = vunpack.c.h.b16 %v284
    %v569 = vunpack.c.l.b16 %v285
    %v570 = vunpack.c.h.b16 %v285
    %v571 = vunpack.c.l.b16 %v286
    %v572 = vunpack.c.h.b16 %v286
    %v573 = vunpack.c.l.b16 %v287
    %v574 = vunpack.c.h.b16 %v287
    %v575 = vunpack.c.l.b16 %v288
    %v576 = vunpack.c.h.b16 %v288
    %v577 = vunpack.c.l.b16 %v289
    %v578 = vunpack.c.h.b16 %v289
    %v579 = vunpack.c.l.b16 %v290
    %v580 = vunpack.c.h.b16 %v290
    %v581 = vunpack.c.l.b16 %v291
    %v582 = vunpack.c.h.b16 %v291
    %v583 = vunpack.c.l.b16 %v292
    %v584 = vunpack.c.h.b16 %v292
    %v585 = vunpack.c.l.b16 %v293
    %v586 = vunpack.c.h.b16 %v293
    %v587 = vunpack.c.l.b16 %v294
    %v588 = vunpack.c.h.b16 %v294
    %v589 = vunpack.c.l.b16 %v295
    %v590 = vunpack.c.h.b16 %v295
    %v591 = vunpack.c.l.b16 %v296
    %v592 = vunpack.c.h.b16 %v296
    %v593 = vunpack.c.l.b16 %v297
    %v594 = vunpack.c.h.b16 %v297
    %v595 = vunpack.c.l.b16 %v298
    %v596 = vunpack.c.h.b16 %v298
    %v597 = vunpack.c.l.b16 %v299
    %v598 = vunpack.c.h.b16 %v299
    %v599 = vunpack.c.l.b16 %v300
    %v600 = vunpack.c.h.b16 %v300
    %v601 = vunpack.c.l.b16 %v301
    %v602 = vunpack.c.h.b16 %v301
    %v603 = vunpack.c.l.b16 %v302
    %v604 = vunpack.c.h.b16 %v302
    %v605 = vunpack.c.l.b16 %v303
    %v606 = vunpack.c.h.b16 %v303
    %v607 = vunpack.c.l.b16 %v304
    %v608 = vunpack.c.h.b16 %v304
    %v609 = vunpack.c.l.b16 %v305
    %v610 = vunpack.c.h.b16 %v305
    %v611 = vunpack.c.l.b16 %v306
    %v612 = vunpack.c.h.b16 %v306
    %v613 = vunpack.c.l.b16 %v307
    %v614 = vunpack.c.h.b16 %v307
    %v615 = vunpack.c.l.b16 %v308
    %v616 = vunpack.c.h.b16 %v308
    %v617 = vunpack.c.l.b16 %v309
    %v618 = vunpack.c.h.b16 %v309
    %v619 = vunpack.c.l.b16 %v310
    %v620 = vunpack.c.h.b16 %v310
    %v621 = vunpack.c.l.b16 %v311
    %v622 = vunpack.c.h.b16 %v311
    %v623 = vunpack.c.l.b16 %v312
    %v624 = vunpack.c.h.b16 %v312
    %v625 = vunpack.c.l.b16 %v313
    %v626 = vunpack.c.h.b16 %v313
    %v627 = vunpack.c.l.b16 %v314
    %v628 = vunpack.c.h.b16 %v314
    %v629 = vunpack.c.l.b16 %v315
    %v630 = vunpack.c.h.b16 %v315
    %v631 = vunpack.c.l.b16 %v316
    %v632 = vunpack.c.h.b16 %v316
    %v633 = vunpack.c.l.b16 %v317
    %v634 = vunpack.c.h.b16 %v317
    %v635 = vunpack.c.l.b16 %v318
    %v636 = vunpack.c.h.b16 %v318
    %v637 = vunpack.c.l.b16 %v319
    %v638 = vunpack.c.h.b16 %v319
    %v639 = vunpack.c.l.b16 %v320
    %v640 = vunpack.c.h.b16 %v320
    %v641 = vunpack.c.l.b16 %v321
    %v642 = vunpack.c.h.b16 %v321
    %v643 = vunpack.c.l.b16 %v322
    %v644 = vunpack.c.h.b16 %v322
    %v645 = vunpack.c.l.b16 %v323
    %v646 = vunpack.c.h.b16 %v323
    %v647 = vunpack.c.l.b16 %v324
    %v648 = vunpack.c.h.b16 %v324
    %v649 = vunpack.c.l.b16 %v325
    %v650 = vunpack.c.h.b16 %v325
    %v651 = vunpack.c.l.b16 %v326
    %v652 = vunpack.c.h.b16 %v326
    %v653 = vunpack.c.l.b16 %v327
    %v654 = vunpack.c.h.b16 %v327
    %v655 = vunpack.c.l.b16 %v328
    %v656 = vunpack.c.h.b16 %v328
    %v657 = vunpack.c.l.b16 %v329
    %v658 = vunpack.c.h.b16 %v329
    %v659 = vunpack.c.l.b16 %v330
    %v660 = vunpack.c.h.b16 %v330
    %v661 = vunpack.c.l.b16 %v331
    %v662 = vunpack.c.h.b16 %v331
    %v663 = vunpack.c.l.b16 %v332
    %v664 = vunpack.c.h.b16 %v332
    %v665 = vunpack.c.l.b16 %v333
    %v666 = vunpack.c.h.b16 %v333
    %v667 = vunpack.c.l.b16 %v334
    %v668 = vunpack.c.h.b16 %v334
    %v669 = vunpack.c.l.b16 %v335
    %v670 = vunpack.c.h.b16 %v335
    %v671 = vunpack.c.l.b16 %v336
    %v672 = vunpack.c.h.b16 %v336
    %v673 = vunpack.c.l.b16 %v337
    %v674 = vunpack.c.h.b16 %v337
    %v675 = vunpack.c.l.b16 %v338
    %v676 = vunpack.c.h.b16 %v338
    %v677 = vunpack.c.l.b16 %v339
    %v678 = vunpack.c.h.b16 %v339
    %v679 = vunpack.c.l.b16 %v340
    %v680 = vunpack.c.h.b16 %v340
    %v681 = vunpack.c.l.b16 %v341
    %v682 = vunpack.c.h.b16 %v341
    %v683 = vunpack.c.l.b16 %v342
    %v684 = vunpack.c.h.b16 %v342
    %v685 = vunpack.c.l.b16 %v343
    %v686 = vunpack.c.h.b16 %v343
    %v687 = vunpack.c.l.b16 %v344
    %v688 = vunpack.c.h.b16 %v344
    %v689 = vunpack.c.l.b16 %v345
    %v690 = vunpack.c.h.b16 %v345
    %v691 = vunpack.c.l.b16 %v346
    %v692 = vunpack.c.h.b16 %v346
    %v693 = vunpack.c.l.b16 %v347
    %v694 = vunpack.c.h.b16 %v347
    %v695 = vunpack.c.l.b16 %v348
    %v696 = vunpack.c.h.b16 %v348
    %v697 = vunpack.c.l.b16 %v349
    %v698 = vunpack.c.h.b16 %v349
    %v699 = vunpack.c.l.b16 %v350
    %v700 = vunpack.c.h.b16 %v350
    %v701 = vunpack.c.l.b16 %v351
    %v702 = vunpack.c.h.b16 %v351
    %v703 = vunpack.c.l.b16 %v352
    %v704 = vunpack.c.h.b16 %v352
    %v705 = vunpack.c.l.b16 %v353
    %v706 = vunpack.c.h.b16 %v353
    %v707 = vunpack.c.l.b16 %v354
    %v708 = vunpack.c.h.b16 %v354
    %v709 = vunpack.c.l.b16 %v355
    %v710 = vunpack.c.h.b16 %v355
    %v711 = vunpack.c.l.b16 %v356
    %v712 = vunpack.c.h.b16 %v356
    %v713 = vunpack.c.l.b16 %v357
    %v714 = vunpack.c.h.b16 %v357
    %v715 = vunpack.c.l.b16 %v358
    %v716 = vunpack.c.h.b16 %v358
    %v717 = vunpack.c.l.b16 %v359
    %v718 = vunpack.c.h.b16 %v359
    %v719 = vunpack.c.l.b16 %v360
    %v720 = vunpack.c.h.b16 %v360
    %v721 = vunpack.c.l.b16 %v361
    %v722 = vunpack.c.h.b16 %v361
    %v723 = vunpack.c.l.b16 %v362
    %v724 = vunpack.c.h.b16 %v362
    %v725 = vunpack.c.l.b16 %v363
    %v726 = vunpack.c.h.b16 %v363
    %v727 = vunpack.c.l.b16 %v364
    %v728 = vunpack.c.h.b16 %v364
    %v729 = vunpack.c.l.b16 %v365
    %v730 = vunpack.c.h.b16 %v365
    %v731 = vunpack.c.l.b16 %v366
    %v732 = vunpack.c.h.b16 %v366
    %v733 = vunpack.c.l.b16 %v367
    %v734 = vunpack.c.h.b16 %v367
    %v735 = vunpack.c.l.b16 %v368
    %v736 = vunpack.c.h.b16 %v368
    %v737 = vunpack.c.l.b16 %v369
    %v738 = vunpack.c.h.b16 %v369
    %v739 = vunpack.c.l.b16 %v370
    %v740 = vunpack.c.h.b16 %v370
    %v741 = vunpack.c.l.b16 %v371
    %v742 = vunpack.c.h.b16 %v371
    %v743 = vunpack.c.l.b16 %v372
    %v744 = vunpack.c.h.b16 %v372
    %v745 = vunpack.c.l.b16 %v373
    %v746 = vunpack.c.h.b16 %v373
    %v747 = vunpack.c.l.b16 %v374
    %v748 = vunpack.c.h.b16 %v374
    %v749 = vunpack.c.l.b16 %v375
    %v750 = vunpack.c.h.b16 %v375
    %v751 = vunpack.c.l.b16 %v376
    %v752 = vunpack.c.h.b16 %v376
    %v753 = vunpack.c.l.b16 %v377
    %v754 = vunpack.c.h.b16 %v377
    %v755 = vunpack.c.l.b16 %v378
    %v756 = vunpack.c.h.b16 %v378
    %v757 = vunpack.c.l.b16 %v379
    %v758 = vunpack.c.h.b16 %v379
    %v759 = vunpack.c.l.b16 %v380
    %v760 = vunpack.c.h.b16 %v380
    %v761 = vunpack.c.l.b16 %v381
    %v762 = vunpack.c.h.b16 %v381
    %v763 = vunpack.c.l.b16 %v382
    %v764 = vunpack.c.h.b16 %v382
    %v765 = vunpack.c.l.b16 %v383
    %v766 = vunpack.c.h.b16 %v383
    %v767 = vunpack.c.l.b16 %v384
    %v768 = vunpack.c.h.b16 %v384
    %v769 = vunpack.c.l.b16 %v385
    %v770 = vunpack.c.h.b16 %v385
    %v771 = vunpack.c.l.b16 %v386
    %v772 = vunpack.c.h.b16 %v386
    %v773 = vunpack.c.l.b16 %v387
    %v774 = vunpack.c.h.b16 %v387
    %v775 = vunpack.c.l.b16 %v388
    %v776 = vunpack.c.h.b16 %v388
    %v777 = vunpack.c.l.b16 %v389
    %v778 = vunpack.c.h.b16 %v389
    %v779 = vunpack.c.l.b16 %v390
    %v780 = vunpack.c.h.b16 %v390
    %v781 = vunpack.c.l.b16 %v391
    %v782 = vunpack.c.h.b16 %v391
    %v783 = vunpack.c.l.b16 %v392
    %v784 = vunpack.c.h.b16 %v392
    %v785 = vunpack.c.l.b16 %v393
    %v786 = vunpack.c.h.b16 %v393
    %v787 = vunpack.c.l.b16 %v394
    %v788 = vunpack.c.h.b16 %v394
    %v789 = vpack.c.b16 %v537, %v533
    %v790 = vpack.c.b16 %v538, %v534
    %v791 = vpack.c.b16 %v539, %v535
    %v792 = vpack.c.b16 %v540, %v536
    %v793 = vpack.c.b16 %v545, %v541
    %v794 = vpack.c.b16 %v546, %v542
    %v795 = vpack.c.b16 %v547, %v543
    %v796 = vpack.c.b16 %v548, %v544
    %v797 = vpack.c.b16 %v553, %v549
    %v798 = vpack.c.b16 %v554, %v550
    %v799 = vpack.c.b16 %v555, %v551
    %v800 = vpack.c.b16 %v556, %v552
    %v801 = vpack.c.b16 %v561, %v557
    %v802 = vpack.c.b16 %v562, %v558
    %v803 = vpack.c.b16 %v563, %v559
    %v804 = vpack.c.b16 %v564, %v560
    %v805 = vpack.c.b16 %v569, %v565
    %v806 = vpack.c.b16 %v570, %v566
    %v807 = vpack.c.b16 %v571, %v567
    %v808 = vpack.c.b16 %v572, %v568
    %v809 = vpack.c.b16 %v577, %v573
    %v810 = vpack.c.b16 %v578, %v574
    %v811 = vpack.c.b16 %v579, %v575
    %v812 = vpack.c.b16 %v580, %v576
    %v813 = vpack.c.b16 %v585, %v581
    %v814 = vpack.c.b16 %v586, %v582
    %v815 = vpack.c.b16 %v587, %v583
    %v816 = vpack.c.b16 %v588, %v584
    %v817 = vpack.c.b16 %v593, %v589
    %v818 = vpack.c.b16 %v594, %v590
    %v819 = vpack.c.b16 %v595, %v591
    %v820 = vpack.c.b16 %v596, %v592
    %v821 = vpack.c.b16 %v601, %v597
    %v822 = vpack.c.b16 %v602, %v598
    %v823 = vpack.c.b16 %v603, %v599
    %v824 = vpack.c.b16 %v604, %v600
    %v825 = vpack.c.b16 %v609, %v605
    %v826 = vpack.c.b16 %v610, %v606
    %v827 = vpack.c.b16 %v611, %v607
    %v828 = vpack.c.b16 %v612, %v608
    %v829 = vpack.c.b16 %v617, %v613
    %v830 = vpack.c.b16 %v618, %v614
    %v831 = vpack.c.b16 %v619, %v615
    %v832 = vpack.c.b16 %v620, %v616
    %v833 = vpack.c.b16 %v625, %v621
    %v834 = vpack.c.b16 %v626, %v622
    %v835 = vpack.c.b16 %v627, %v623
    %v836 = vpack.c.b16 %v628, %v624
    %v837 = vpack.c.b16 %v633, %v629
    %v838 = vpack.c.b16 %v634, %v630
    %v839 = vpack.c.b16 %v635, %v631
    %v840 = vpack.c.b16 %v636, %v632
    %v841 = vpack.c.b16 %v641, %v637
    %v842 = vpack.c.b16 %v642, %v638
    %v843 = vpack.c.b16 %v643, %v639
    %v844 = vpack.c.b16 %v644, %v640
    %v845 = vpack.c.b16 %v649, %v645
    %v846 = vpack.c.b16 %v650, %v646
    %v847 = vpack.c.b16 %v651, %v647
    %v848 = vpack.c.b16 %v652, %v648
    %v849 = vpack.c.b16 %v657, %v653
    %v850 = vpack.c.b16 %v658, %v654
    %v851 = vpack.c.b16 %v659, %v655
    %v852 = vpack.c.b16 %v660, %v656
    %v853 = vpack.c.b16 %v665, %v661
    %v854 = vpack.c.b16 %v666, %v662
    %v855 = vpack.c.b16 %v667, %v663
    %v856 = vpack.c.b16 %v668, %v664
    %v857 = vpack.c.b16 %v673, %v669
    %v858 = vpack.c.b16 %v674, %v670
    %v859 = vpack.c.b16 %v675, %v671
    %v860 = vpack.c.b16 %v676, %v672
    %v861 = vpack.c.b16 %v681, %v677
    %v862 = vpack.c.b16 %v682, %v678
    %v863 = vpack.c.b16 %v683, %v679
    %v864 = vpack.c.b16 %v684, %v680
    %v865 = vpack.c.b16 %v689, %v685
    %v866 = vpack.c.b16 %v690, %v686
    %v867 = vpack.c.b16 %v691, %v687
    %v868 = vpack.c.b16 %v692, %v688
    %v869 = vpack.c.b16 %v697, %v693
    %v870 = vpack.c.b16 %v698, %v694
    %v871 = vpack.c.b16 %v699, %v695
    %v872 = vpack.c.b16 %v700, %v696
    %v873 = vpack.c.b16 %v705, %v701
    %v874 = vpack.c.b16 %v706, %v702
    %v875 = vpack.c.b16 %v707, %v703
    %v876 = vpack.c.b16 %v708, %v704
    %v877 = vpack.c.b16 %v713, %v709
    %v878 = vpack.c.b16 %v714, %v710
    %v879 = vpack.c.b16 %v715, %v711
    %v880 = vpack.c.b16 %v716, %v712
    %v881 = vpack.c.b16 %v721, %v717
    %v882 = vpack.c.b16 %v722, %v718
    %v883 = vpack.c.b16 %v723, %v719
    %v884 = vpack.c.b16 %v724, %v720
    %v885 = vpack.c.b16 %v729, %v725
    %v886 = vpack.c.b16 %v730, %v726
    %v887 = vpack.c.b16 %v731, %v727
    %v888 = vpack.c.b16 %v732, %v728
    %v889 = vpack.c.b16 %v737, %v733
    %v890 = vpack.c.b16 %v738, %v734
    %v891 = vpack.c.b16 %v739, %v735
    %v892 = vpack.c.b16 %v740, %v736
    %v893 = vpack.c.b16 %v745, %v741
    %v894 = vpack.c.b16 %v746, %v742
    %v895 = vpack.c.b16 %v747, %v743
    %v896 = vpack.c.b16 %v748, %v744
    %v897 = vpack.c.b16 %v753, %v749
    %v898 = vpack.c.b16 %v754, %v750
    %v899 = vpack.c.b16 %v755, %v751
    %v900 = vpack.c.b16 %v756, %v752
    %v901 = vpack.c.b16 %v761, %v757
    %v902 = vpack.c.b16 %v762, %v758
    %v903 = vpack.c.b16 %v763, %v759
    %v904 = vpack.c.b16 %v764, %v760
    %v905 = vpack.c.b16 %v769, %v765
    %v906 = vpack.c.b16 %v770, %v766
    %v907 = vpack.c.b16 %v771, %v767
    %v908 = vpack.c.b16 %v772, %v768
    %v909 = vpack.c.b16 %v777, %v773
    %v910 = vpack.c.b16 %v778, %v774
    %v911 = vpack.c.b16 %v779, %v775
    %v912 = vpack.c.b16 %v780, %v776
    %v913 = vpack.c.b16 %v785, %v781
    %v914 = vpack.c.b16 %v786, %v782
    %v915 = vpack.c.b16 %v787, %v783
    %v916 = vpack.c.b16 %v788, %v784
    %1045 = vmatpush.bf16.msra.mxu0 %v817
    %1046 = vmatpush.bf16.msra.mxu0 %v813
    %1047 = vmatpush.bf16.msra.mxu0 %v809
    %1048 = vmatpush.bf16.msra.mxu0 %v805
    %1049 = vmatpush.bf16.msra.mxu0 %v801
    %1050 = vmatpush.bf16.msra.mxu0 %v797
    %1051 = vmatpush.bf16.msra.mxu0 %v793
    %1052 = vmatpush.bf16.msra.mxu0 %v789
    %1053 = vmatmul.bf16.gmra.mxu0 %v263
    %v1054 = vpop.f32.mrf.mxu0
    %v1055 = vadd.f32 %v397, %v1054
    %v1056 = vpop.f32.mrf.mxu0
    %1057 = vdwg.mxu0
    %1058 = vmatpush.bf16.msra.mxu0 %v849
    %1059 = vmatpush.bf16.msra.mxu0 %v845
    %1060 = vmatpush.bf16.msra.mxu0 %v841
    %1061 = vmatpush.bf16.msra.mxu0 %v837
    %1062 = vmatpush.bf16.msra.mxu0 %v833
    %1063 = vmatpush.bf16.msra.mxu0 %v829
    %1064 = vmatpush.bf16.msra.mxu0 %v825
    %1065 = vmatpush.bf16.msra.mxu0 %v821
    %1066 = vmatmul.bf16.gmra.mxu0 %v264
    %v1067 = vpop.f32.mrf.mxu0
    %v1068 = vadd.f32 %v1055, %v1067
    %v1069 = vpop.f32.mrf.mxu0
    %1070 = vdwg.mxu0
    %1071 = vmatpush.bf16.msra.mxu0 %v881
    %1072 = vmatpush.bf16.msra.mxu0 %v877
    %1073 = vmatpush.bf16.msra.mxu0 %v873
    %1074 = vmatpush.bf16.msra.mxu0 %v869
    %1075 = vmatpush.bf16.msra.mxu0 %v865
    %1076 = vmatpush.bf16.msra.mxu0 %v861
    %1077 = vmatpush.bf16.msra.mxu0 %v857
    %1078 = vmatpush.bf16.msra.mxu0 %v853
    %1079 = vmatmul.bf16.gmra.mxu0 %v265
    %v1080 = vpop.f32.mrf.mxu0
    %v1081 = vadd.f32 %v1068, %v1080
    %v1082 = vpop.f32.mrf.mxu0
    %1083 = vdwg.mxu0
    %1084 = vmatpush.bf16.msra.mxu0 %v913
    %1085 = vmatpush.bf16.msra.mxu0 %v909
    %1086 = vmatpush.bf16.msra.mxu0 %v905
    %1087 = vmatpush.bf16.msra.mxu0 %v901
    %1088 = vmatpush.bf16.msra.mxu0 %v897
    %1089 = vmatpush.bf16.msra.mxu0 %v893
    %1090 = vmatpush.bf16.msra.mxu0 %v889
    %1091 = vmatpush.bf16.msra.mxu0 %v885
    %1092 = vmatmul.bf16.gmra.mxu0 %v266
    %v1093 = vpop.f32.mrf.mxu0
    %v1094 = vadd.f32 %v1081, %v1093
    %v1095 = vpop.f32.mrf.mxu0
    %1096 = vdwg.mxu0
    %1097 = vmatpush.bf16.msra.mxu0 %v818
    %1098 = vmatpush.bf16.msra.mxu0 %v814
    %1099 = vmatpush.bf16.msra.mxu0 %v810
    %1100 = vmatpush.bf16.msra.mxu0 %v806
    %1101 = vmatpush.bf16.msra.mxu0 %v802
    %1102 = vmatpush.bf16.msra.mxu0 %v798
    %1103 = vmatpush.bf16.msra.mxu0 %v794
    %1104 = vmatpush.bf16.msra.mxu0 %v790
    %1105 = vmatmul.bf16.gmra.mxu0 %v263
    %v1106 = vpop.f32.mrf.mxu0
    %v1107 = vadd.f32 %v398, %v1106
    %v1108 = vpop.f32.mrf.mxu0
    %1109 = vdwg.mxu0
    %1110 = vmatpush.bf16.msra.mxu0 %v850
    %1111 = vmatpush.bf16.msra.mxu0 %v846
    %1112 = vmatpush.bf16.msra.mxu0 %v842
    %1113 = vmatpush.bf16.msra.mxu0 %v838
    %1114 = vmatpush.bf16.msra.mxu0 %v834
    %1115 = vmatpush.bf16.msra.mxu0 %v830
    %1116 = vmatpush.bf16.msra.mxu0 %v826
    %1117 = vmatpush.bf16.msra.mxu0 %v822
    %1118 = vmatmul.bf16.gmra.mxu0 %v264
    %v1119 = vpop.f32.mrf.mxu0
    %v1120 = vadd.f32 %v1107, %v1119
    %v1121 = vpop.f32.mrf.mxu0
    %1122 = vdwg.mxu0
    %1123 = vmatpush.bf16.msra.mxu0 %v882
    %1124 = vmatpush.bf16.msra.mxu0 %v878
    %1125 = vmatpush.bf16.msra.mxu0 %v874
    %1126 = vmatpush.bf16.msra.mxu0 %v870
    %1127 = vmatpush.bf16.msra.mxu0 %v866
    %1128 = vmatpush.bf16.msra.mxu0 %v862
    %1129 = vmatpush.bf16.msra.mxu0 %v858
    %1130 = vmatpush.bf16.msra.mxu0 %v854
    %1131 = vmatmul.bf16.gmra.mxu0 %v265
    %v1132 = vpop.f32.mrf.mxu0
    %v1133 = vadd.f32 %v1120, %v1132
    %v1134 = vpop.f32.mrf.mxu0
    %1135 = vdwg.mxu0
    %1136 = vmatpush.bf16.msra.mxu0 %v914
    %1137 = vmatpush.bf16.msra.mxu0 %v910
    %1138 = vmatpush.bf16.msra.mxu0 %v906
    %1139 = vmatpush.bf16.msra.mxu0 %v902
    %1140 = vmatpush.bf16.msra.mxu0 %v898
    %1141 = vmatpush.bf16.msra.mxu0 %v894
    %1142 = vmatpush.bf16.msra.mxu0 %v890
    %1143 = vmatpush.bf16.msra.mxu0 %v886
    %1144 = vmatmul.bf16.gmra.mxu0 %v266
    %v1145 = vpop.f32.mrf.mxu0
    %v1146 = vadd.f32 %v1133, %v1145
    %v1147 = vpop.f32.mrf.mxu0
    %1148 = vdwg.mxu0
    %1149 = vmatpush.bf16.msra.mxu0 %v819
    %1150 = vmatpush.bf16.msra.mxu0 %v815
    %1151 = vmatpush.bf16.msra.mxu0 %v811
    %1152 = vmatpush.bf16.msra.mxu0 %v807
    %1153 = vmatpush.bf16.msra.mxu0 %v803
    %1154 = vmatpush.bf16.msra.mxu0 %v799
    %1155 = vmatpush.bf16.msra.mxu0 %v795
    %1156 = vmatpush.bf16.msra.mxu0 %v791
    %1157 = vmatmul.bf16.gmra.mxu0 %v263
    %v1158 = vpop.f32.mrf.mxu0
    %v1159 = vadd.f32 %v399, %v1158
    %v1160 = vpop.f32.mrf.mxu0
    %1161 = vdwg.mxu0
    %1162 = vmatpush.bf16.msra.mxu0 %v851
    %1163 = vmatpush.bf16.msra.mxu0 %v847
    %1164 = vmatpush.bf16.msra.mxu0 %v843
    %1165 = vmatpush.bf16.msra.mxu0 %v839
    %1166 = vmatpush.bf16.msra.mxu0 %v835
    %1167 = vmatpush.bf16.msra.mxu0 %v831
    %1168 = vmatpush.bf16.msra.mxu0 %v827
    %1169 = vmatpush.bf16.msra.mxu0 %v823
    %1170 = vmatmul.bf16.gmra.mxu0 %v264
    %v1171 = vpop.f32.mrf.mxu0
    %v1172 = vadd.f32 %v1159, %v1171
    %v1173 = vpop.f32.mrf.mxu0
    %1174 = vdwg.mxu0
    %1175 = vmatpush.bf16.msra.mxu0 %v883
    %1176 = vmatpush.bf16.msra.mxu0 %v879
    %1177 = vmatpush.bf16.msra.mxu0 %v875
    %1178 = vmatpush.bf16.msra.mxu0 %v871
    %1179 = vmatpush.bf16.msra.mxu0 %v867
    %1180 = vmatpush.bf16.msra.mxu0 %v863
    %1181 = vmatpush.bf16.msra.mxu0 %v859
    %1182 = vmatpush.bf16.msra.mxu0 %v855
    %1183 = vmatmul.bf16.gmra.mxu0 %v265
    %v1184 = vpop.f32.mrf.mxu0
    %v1185 = vadd.f32 %v1172, %v1184
    %v1186 = vpop.f32.mrf.mxu0
    %1187 = vdwg.mxu0
    %1188 = vmatpush.bf16.msra.mxu0 %v915
    %1189 = vmatpush.bf16.msra.mxu0 %v911
    %1190 = vmatpush.bf16.msra.mxu0 %v907
    %1191 = vmatpush.bf16.msra.mxu0 %v903
    %1192 = vmatpush.bf16.msra.mxu0 %v899
    %1193 = vmatpush.bf16.msra.mxu0 %v895
    %1194 = vmatpush.bf16.msra.mxu0 %v891
    %1195 = vmatpush.bf16.msra.mxu0 %v887
    %1196 = vmatmul.bf16.gmra.mxu0 %v266
    %v1197 = vpop.f32.mrf.mxu0
    %v1198 = vadd.f32 %v1185, %v1197
    %v1199 = vpop.f32.mrf.mxu0
    %1200 = vdwg.mxu0
    %1201 = vmatpush.bf16.msra.mxu0 %v820
    %1202 = vmatpush.bf16.msra.mxu0 %v816
    %1203 = vmatpush.bf16.msra.mxu0 %v812
    %1204 = vmatpush.bf16.msra.mxu0 %v808
    %1205 = vmatpush.bf16.msra.mxu0 %v804
    %1206 = vmatpush.bf16.msra.mxu0 %v800
    %1207 = vmatpush.bf16.msra.mxu0 %v796
    %1208 = vmatpush.bf16.msra.mxu0 %v792
    %1209 = vmatmul.bf16.gmra.mxu0 %v263
    %v1210 = vpop.f32.mrf.mxu0
    %v1211 = vadd.f32 %v400, %v1210
    %v1212 = vpop.f32.mrf.mxu0
    %1213 = vdwg.mxu0
    %1214 = vmatpush.bf16.msra.mxu0 %v852
    %1215 = vmatpush.bf16.msra.mxu0 %v848
    %1216 = vmatpush.bf16.msra.mxu0 %v844
    %1217 = vmatpush.bf16.msra.mxu0 %v840
    %1218 = vmatpush.bf16.msra.mxu0 %v836
    %1219 = vmatpush.bf16.msra.mxu0 %v832
    %1220 = vmatpush.bf16.msra.mxu0 %v828
    %1221 = vmatpush.bf16.msra.mxu0 %v824
    %1222 = vmatmul.bf16.gmra.mxu0 %v264
    %v1223 = vpop.f32.mrf.mxu0
    %v1224 = vadd.f32 %v1211, %v1223
    %v1225 = vpop.f32.mrf.mxu0
    %1226 = vdwg.mxu0
    %1227 = vmatpush.bf16.msra.mxu0 %v884
    %1228 = vmatpush.bf16.msra.mxu0 %v880
    %1229 = vmatpush.bf16.msra.mxu0 %v876
    %1230 = vmatpush.bf16.msra.mxu0 %v872
    %1231 = vmatpush.bf16.msra.mxu0 %v868
    %1232 = vmatpush.bf16.msra.mxu0 %v864
    %1233 = vmatpush.bf16.msra.mxu0 %v860
    %1234 = vmatpush.bf16.msra.mxu0 %v856
    %1235 = vmatmul.bf16.gmra.mxu0 %v265
    %v1236 = vpop.f32.mrf.mxu0
    %v1237 = vadd.f32 %v1224, %v1236
    %v1238 = vpop.f32.mrf.mxu0
    %1239 = vdwg.mxu0
    %1240 = vmatpush.bf16.msra.mxu0 %v916
    %1241 = vmatpush.bf16.msra.mxu0 %v912
    %1242 = vmatpush.bf16.msra.mxu0 %v908
    %1243 = vmatpush.bf16.msra.mxu0 %v904
    %1244 = vmatpush.bf16.msra.mxu0 %v900
    %1245 = vmatpush.bf16.msra.mxu0 %v896
    %1246 = vmatpush.bf16.msra.mxu0 %v892
    %1247 = vmatpush.bf16.msra.mxu0 %v888
    %1248 = vmatmul.bf16.gmra.mxu0 %v266
    %v1249 = vpop.f32.mrf.mxu0
    %v1250 = vadd.f32 %v1237, %v1249
    %v1251 = vpop.f32.mrf.mxu0
    %1252 = vdwg.mxu0
    %v1253 = vpack.c.bf16 %v1146, %v1094
    %v1254 = vpack.c.bf16 %v1250, %v1198
    %v1255 = vunpack.c.l.bf16 %v1253
    %v1256 = vunpack.c.h.bf16 %v1253
    %v1257 = vunpack.c.l.bf16 %v1254
    %v1258 = vunpack.c.h.bf16 %v1254
    %v1259 = vmax.f32 %v1255, 0.0
    %v1260 = vmax.f32 %v1256, 0.0
    %v1261 = vmax.f32 %v1257, 0.0
    %v1262 = vmax.f32 %v1258, 0.0
    %v1263 = vpack.c.bf16 %v1259, %v1259
    %v1264 = vpack.c.bf16 %v1260, %v1260
    %v1265 = vpack.c.bf16 %v1261, %v1261
    %v1266 = vpack.c.bf16 %v1262, %v1262
    %v1267 = vld [vmem:[#allocation11] sm:$0xff]
    %v1268 = vld [vmem:[#allocation11 + $0x8] sm:$0xff]
    %v1269 = vld [vmem:[#allocation11 + $0x10] sm:$0xff]
    %v1270 = vld [vmem:[#allocation11 + $0x18] sm:$0xff]
    %v1271 = vld [vmem:[#allocation11 + $0x20] sm:$0xff]
    %v1272 = vld [vmem:[#allocation11 + $0x28] sm:$0xff]
    %v1273 = vld [vmem:[#allocation11 + $0x30] sm:$0xff]
    %v1274 = vld [vmem:[#allocation11 + $0x38] sm:$0xff]
    %v1275 = vld [vmem:[#allocation11 + $0x40] sm:$0xff]
    %v1276 = vld [vmem:[#allocation11 + $0x48] sm:$0xff]
    %v1277 = vld [vmem:[#allocation11 + $0x50] sm:$0xff]
    %v1278 = vld [vmem:[#allocation11 + $0x58] sm:$0xff]
    %v1279 = vld [vmem:[#allocation11 + $0x60] sm:$0xff]
    %v1280 = vld [vmem:[#allocation11 + $0x68] sm:$0xff]
    %v1281 = vld [vmem:[#allocation11 + $0x70] sm:$0xff]
    %v1282 = vld [vmem:[#allocation11 + $0x78] sm:$0xff]
    %v1283 = vld [vmem:[#allocation11 + $0x80] sm:$0xff]
    %v1284 = vld [vmem:[#allocation11 + $0x88] sm:$0xff]
    %v1285 = vld [vmem:[#allocation11 + $0x90] sm:$0xff]
    %v1286 = vld [vmem:[#allocation11 + $0x98] sm:$0xff]
    %v1287 = vld [vmem:[#allocation11 + $0xa0] sm:$0xff]
    %v1288 = vld [vmem:[#allocation11 + $0xa8] sm:$0xff]
    %v1289 = vld [vmem:[#allocation11 + $0xb0] sm:$0xff]
    %v1290 = vld [vmem:[#allocation11 + $0xb8] sm:$0xff]
    %v1291 = vld [vmem:[#allocation11 + $0xc0] sm:$0xff]
    %v1292 = vld [vmem:[#allocation11 + $0xc8] sm:$0xff]
    %v1293 = vld [vmem:[#allocation11 + $0xd0] sm:$0xff]
    %v1294 = vld [vmem:[#allocation11 + $0xd8] sm:$0xff]
    %v1295 = vld [vmem:[#allocation11 + $0xe0] sm:$0xff]
    %v1296 = vld [vmem:[#allocation11 + $0xe8] sm:$0xff]
    %v1297 = vld [vmem:[#allocation11 + $0xf0] sm:$0xff]
    %v1298 = vld [vmem:[#allocation11 + $0xf8] sm:$0xff]
    %v1299 = vld [vmem:[#allocation11 + $0x100] sm:$0xff]
    %v1300 = vld [vmem:[#allocation11 + $0x108] sm:$0xff]
    %v1301 = vld [vmem:[#allocation11 + $0x110] sm:$0xff]
    %v1302 = vld [vmem:[#allocation11 + $0x118] sm:$0xff]
    %v1303 = vld [vmem:[#allocation11 + $0x120] sm:$0xff]
    %v1304 = vld [vmem:[#allocation11 + $0x128] sm:$0xff]
    %v1305 = vld [vmem:[#allocation11 + $0x130] sm:$0xff]
    %v1306 = vld [vmem:[#allocation11 + $0x138] sm:$0xff]
    %v1307 = vld [vmem:[#allocation11 + $0x140] sm:$0xff]
    %v1308 = vld [vmem:[#allocation11 + $0x148] sm:$0xff]
    %v1309 = vld [vmem:[#allocation11 + $0x150] sm:$0xff]
    %v1310 = vld [vmem:[#allocation11 + $0x158] sm:$0xff]
    %v1311 = vld [vmem:[#allocation11 + $0x160] sm:$0xff]
    %v1312 = vld [vmem:[#allocation11 + $0x168] sm:$0xff]
    %v1313 = vld [vmem:[#allocation11 + $0x170] sm:$0xff]
    %v1314 = vld [vmem:[#allocation11 + $0x178] sm:$0xff]
    %v1315 = vld [vmem:[#allocation11 + $0x180] sm:$0xff]
    %v1316 = vld [vmem:[#allocation11 + $0x188] sm:$0xff]
    %v1317 = vld [vmem:[#allocation11 + $0x190] sm:$0xff]
    %v1318 = vld [vmem:[#allocation11 + $0x198] sm:$0xff]
    %v1319 = vld [vmem:[#allocation11 + $0x1a0] sm:$0xff]
    %v1320 = vld [vmem:[#allocation11 + $0x1a8] sm:$0xff]
    %v1321 = vld [vmem:[#allocation11 + $0x1b0] sm:$0xff]
    %v1322 = vld [vmem:[#allocation11 + $0x1b8] sm:$0xff]
    %v1323 = vld [vmem:[#allocation11 + $0x1c0] sm:$0xff]
    %v1324 = vld [vmem:[#allocation11 + $0x1c8] sm:$0xff]
    %v1325 = vld [vmem:[#allocation11 + $0x1d0] sm:$0xff]
    %v1326 = vld [vmem:[#allocation11 + $0x1d8] sm:$0xff]
    %v1327 = vld [vmem:[#allocation11 + $0x1e0] sm:$0xff]
    %v1328 = vld [vmem:[#allocation11 + $0x1e8] sm:$0xff]
    %v1329 = vld [vmem:[#allocation11 + $0x1f0] sm:$0xff]
    %v1330 = vld [vmem:[#allocation11 + $0x1f8] sm:$0xff]
    %v1331 = vld [vmem:[#allocation11 + $0x200] sm:$0xff]
    %v1332 = vld [vmem:[#allocation11 + $0x208] sm:$0xff]
    %v1333 = vld [vmem:[#allocation11 + $0x210] sm:$0xff]
    %v1334 = vld [vmem:[#allocation11 + $0x218] sm:$0xff]
    %v1335 = vld [vmem:[#allocation11 + $0x220] sm:$0xff]
    %v1336 = vld [vmem:[#allocation11 + $0x228] sm:$0xff]
    %v1337 = vld [vmem:[#allocation11 + $0x230] sm:$0xff]
    %v1338 = vld [vmem:[#allocation11 + $0x238] sm:$0xff]
    %v1339 = vld [vmem:[#allocation11 + $0x240] sm:$0xff]
    %v1340 = vld [vmem:[#allocation11 + $0x248] sm:$0xff]
    %v1341 = vld [vmem:[#allocation11 + $0x250] sm:$0xff]
    %v1342 = vld [vmem:[#allocation11 + $0x258] sm:$0xff]
    %v1343 = vld [vmem:[#allocation11 + $0x260] sm:$0xff]
    %v1344 = vld [vmem:[#allocation11 + $0x268] sm:$0xff]
    %v1345 = vld [vmem:[#allocation11 + $0x270] sm:$0xff]
    %v1346 = vld [vmem:[#allocation11 + $0x278] sm:$0xff]
    %v1347 = vld [vmem:[#allocation11 + $0x280] sm:$0xff]
    %v1348 = vld [vmem:[#allocation11 + $0x288] sm:$0xff]
    %v1349 = vld [vmem:[#allocation11 + $0x290] sm:$0xff]
    %v1350 = vld [vmem:[#allocation11 + $0x298] sm:$0xff]
    %v1351 = vld [vmem:[#allocation11 + $0x2a0] sm:$0xff]
    %v1352 = vld [vmem:[#allocation11 + $0x2a8] sm:$0xff]
    %v1353 = vld [vmem:[#allocation11 + $0x2b0] sm:$0xff]
    %v1354 = vld [vmem:[#allocation11 + $0x2b8] sm:$0xff]
    %v1355 = vld [vmem:[#allocation11 + $0x2c0] sm:$0xff]
    %v1356 = vld [vmem:[#allocation11 + $0x2c8] sm:$0xff]
    %v1357 = vld [vmem:[#allocation11 + $0x2d0] sm:$0xff]
    %v1358 = vld [vmem:[#allocation11 + $0x2d8] sm:$0xff]
    %v1359 = vld [vmem:[#allocation11 + $0x2e0] sm:$0xff]
    %v1360 = vld [vmem:[#allocation11 + $0x2e8] sm:$0xff]
    %v1361 = vld [vmem:[#allocation11 + $0x2f0] sm:$0xff]
    %v1362 = vld [vmem:[#allocation11 + $0x2f8] sm:$0xff]
    %v1363 = vld [vmem:[#allocation11 + $0x300] sm:$0xff]
    %v1364 = vld [vmem:[#allocation11 + $0x308] sm:$0xff]
    %v1365 = vld [vmem:[#allocation11 + $0x310] sm:$0xff]
    %v1366 = vld [vmem:[#allocation11 + $0x318] sm:$0xff]
    %v1367 = vld [vmem:[#allocation11 + $0x320] sm:$0xff]
    %v1368 = vld [vmem:[#allocation11 + $0x328] sm:$0xff]
    %v1369 = vld [vmem:[#allocation11 + $0x330] sm:$0xff]
    %v1370 = vld [vmem:[#allocation11 + $0x338] sm:$0xff]
    %v1371 = vld [vmem:[#allocation11 + $0x340] sm:$0xff]
    %v1372 = vld [vmem:[#allocation11 + $0x348] sm:$0xff]
    %v1373 = vld [vmem:[#allocation11 + $0x350] sm:$0xff]
    %v1374 = vld [vmem:[#allocation11 + $0x358] sm:$0xff]
    %v1375 = vld [vmem:[#allocation11 + $0x360] sm:$0xff]
    %v1376 = vld [vmem:[#allocation11 + $0x368] sm:$0xff]
    %v1377 = vld [vmem:[#allocation11 + $0x370] sm:$0xff]
    %v1378 = vld [vmem:[#allocation11 + $0x378] sm:$0xff]
    %v1379 = vld [vmem:[#allocation11 + $0x380] sm:$0xff]
    %v1380 = vld [vmem:[#allocation11 + $0x388] sm:$0xff]
    %v1381 = vld [vmem:[#allocation11 + $0x390] sm:$0xff]
    %v1382 = vld [vmem:[#allocation11 + $0x398] sm:$0xff]
    %v1383 = vld [vmem:[#allocation11 + $0x3a0] sm:$0xff]
    %v1384 = vld [vmem:[#allocation11 + $0x3a8] sm:$0xff]
    %v1385 = vld [vmem:[#allocation11 + $0x3b0] sm:$0xff]
    %v1386 = vld [vmem:[#allocation11 + $0x3b8] sm:$0xff]
    %v1387 = vld [vmem:[#allocation11 + $0x3c0] sm:$0xff]
    %v1388 = vld [vmem:[#allocation11 + $0x3c8] sm:$0xff]
    %v1389 = vld [vmem:[#allocation11 + $0x3d0] sm:$0xff]
    %v1390 = vld [vmem:[#allocation11 + $0x3d8] sm:$0xff]
    %v1391 = vld [vmem:[#allocation11 + $0x3e0] sm:$0xff]
    %v1392 = vld [vmem:[#allocation11 + $0x3e8] sm:$0xff]
    %v1393 = vld [vmem:[#allocation11 + $0x3f0] sm:$0xff]
    %v1394 = vld [vmem:[#allocation11 + $0x3f8] sm:$0xff]
    %v1395 = vld [vmem:[%s6] sm:$0xf]
    %v1397 = vperm.slane %v1395, 0
    %v1398 = vperm.slane %v1395, 1
    %v1399 = vperm.slane %v1395, 2
    %v1400 = vperm.slane %v1395, 3
    %v1533 = vunpack.c.l.b16 %v1267
    %v1534 = vunpack.c.h.b16 %v1267
    %v1535 = vunpack.c.l.b16 %v1268
    %v1536 = vunpack.c.h.b16 %v1268
    %v1537 = vunpack.c.l.b16 %v1269
    %v1538 = vunpack.c.h.b16 %v1269
    %v1539 = vunpack.c.l.b16 %v1270
    %v1540 = vunpack.c.h.b16 %v1270
    %v1541 = vunpack.c.l.b16 %v1271
    %v1542 = vunpack.c.h.b16 %v1271
    %v1543 = vunpack.c.l.b16 %v1272
    %v1544 = vunpack.c.h.b16 %v1272
    %v1545 = vunpack.c.l.b16 %v1273
    %v1546 = vunpack.c.h.b16 %v1273
    %v1547 = vunpack.c.l.b16 %v1274
    %v1548 = vunpack.c.h.b16 %v1274
    %v1549 = vunpack.c.l.b16 %v1275
    %v1550 = vunpack.c.h.b16 %v1275
    %v1551 = vunpack.c.l.b16 %v1276
    %v1552 = vunpack.c.h.b16 %v1276
    %v1553 = vunpack.c.l.b16 %v1277
    %v1554 = vunpack.c.h.b16 %v1277
    %v1555 = vunpack.c.l.b16 %v1278
    %v1556 = vunpack.c.h.b16 %v1278
    %v1557 = vunpack.c.l.b16 %v1279
    %v1558 = vunpack.c.h.b16 %v1279
    %v1559 = vunpack.c.l.b16 %v1280
    %v1560 = vunpack.c.h.b16 %v1280
    %v1561 = vunpack.c.l.b16 %v1281
    %v1562 = vunpack.c.h.b16 %v1281
    %v1563 = vunpack.c.l.b16 %v1282
    %v1564 = vunpack.c.h.b16 %v1282
    %v1565 = vunpack.c.l.b16 %v1283
    %v1566 = vunpack.c.h.b16 %v1283
    %v1567 = vunpack.c.l.b16 %v1284
    %v1568 = vunpack.c.h.b16 %v1284
    %v1569 = vunpack.c.l.b16 %v1285
    %v1570 = vunpack.c.h.b16 %v1285
    %v1571 = vunpack.c.l.b16 %v1286
    %v1572 = vunpack.c.h.b16 %v1286
    %v1573 = vunpack.c.l.b16 %v1287
    %v1574 = vunpack.c.h.b16 %v1287
    %v1575 = vunpack.c.l.b16 %v1288
    %v1576 = vunpack.c.h.b16 %v1288
    %v1577 = vunpack.c.l.b16 %v1289
    %v1578 = vunpack.c.h.b16 %v1289
    %v1579 = vunpack.c.l.b16 %v1290
    %v1580 = vunpack.c.h.b16 %v1290
    %v1581 = vunpack.c.l.b16 %v1291
    %v1582 = vunpack.c.h.b16 %v1291
    %v1583 = vunpack.c.l.b16 %v1292
    %v1584 = vunpack.c.h.b16 %v1292
    %v1585 = vunpack.c.l.b16 %v1293
    %v1586 = vunpack.c.h.b16 %v1293
    %v1587 = vunpack.c.l.b16 %v1294
    %v1588 = vunpack.c.h.b16 %v1294
    %v1589 = vunpack.c.l.b16 %v1295
    %v1590 = vunpack.c.h.b16 %v1295
    %v1591 = vunpack.c.l.b16 %v1296
    %v1592 = vunpack.c.h.b16 %v1296
    %v1593 = vunpack.c.l.b16 %v1297
    %v1594 = vunpack.c.h.b16 %v1297
    %v1595 = vunpack.c.l.b16 %v1298
    %v1596 = vunpack.c.h.b16 %v1298
    %v1597 = vunpack.c.l.b16 %v1299
    %v1598 = vunpack.c.h.b16 %v1299
    %v1599 = vunpack.c.l.b16 %v1300
    %v1600 = vunpack.c.h.b16 %v1300
    %v1601 = vunpack.c.l.b16 %v1301
    %v1602 = vunpack.c.h.b16 %v1301
    %v1603 = vunpack.c.l.b16 %v1302
    %v1604 = vunpack.c.h.b16 %v1302
    %v1605 = vunpack.c.l.b16 %v1303
    %v1606 = vunpack.c.h.b16 %v1303
    %v1607 = vunpack.c.l.b16 %v1304
    %v1608 = vunpack.c.h.b16 %v1304
    %v1609 = vunpack.c.l.b16 %v1305
    %v1610 = vunpack.c.h.b16 %v1305
    %v1611 = vunpack.c.l.b16 %v1306
    %v1612 = vunpack.c.h.b16 %v1306
    %v1613 = vunpack.c.l.b16 %v1307
    %v1614 = vunpack.c.h.b16 %v1307
    %v1615 = vunpack.c.l.b16 %v1308
    %v1616 = vunpack.c.h.b16 %v1308
    %v1617 = vunpack.c.l.b16 %v1309
    %v1618 = vunpack.c.h.b16 %v1309
    %v1619 = vunpack.c.l.b16 %v1310
    %v1620 = vunpack.c.h.b16 %v1310
    %v1621 = vunpack.c.l.b16 %v1311
    %v1622 = vunpack.c.h.b16 %v1311
    %v1623 = vunpack.c.l.b16 %v1312
    %v1624 = vunpack.c.h.b16 %v1312
    %v1625 = vunpack.c.l.b16 %v1313
    %v1626 = vunpack.c.h.b16 %v1313
    %v1627 = vunpack.c.l.b16 %v1314
    %v1628 = vunpack.c.h.b16 %v1314
    %v1629 = vunpack.c.l.b16 %v1315
    %v1630 = vunpack.c.h.b16 %v1315
    %v1631 = vunpack.c.l.b16 %v1316
    %v1632 = vunpack.c.h.b16 %v1316
    %v1633 = vunpack.c.l.b16 %v1317
    %v1634 = vunpack.c.h.b16 %v1317
    %v1635 = vunpack.c.l.b16 %v1318
    %v1636 = vunpack.c.h.b16 %v1318
    %v1637 = vunpack.c.l.b16 %v1319
    %v1638 = vunpack.c.h.b16 %v1319
    %v1639 = vunpack.c.l.b16 %v1320
    %v1640 = vunpack.c.h.b16 %v1320
    %v1641 = vunpack.c.l.b16 %v1321
    %v1642 = vunpack.c.h.b16 %v1321
    %v1643 = vunpack.c.l.b16 %v1322
    %v1644 = vunpack.c.h.b16 %v1322
    %v1645 = vunpack.c.l.b16 %v1323
    %v1646 = vunpack.c.h.b16 %v1323
    %v1647 = vunpack.c.l.b16 %v1324
    %v1648 = vunpack.c.h.b16 %v1324
    %v1649 = vunpack.c.l.b16 %v1325
    %v1650 = vunpack.c.h.b16 %v1325
    %v1651 = vunpack.c.l.b16 %v1326
    %v1652 = vunpack.c.h.b16 %v1326
    %v1653 = vunpack.c.l.b16 %v1327
    %v1654 = vunpack.c.h.b16 %v1327
    %v1655 = vunpack.c.l.b16 %v1328
    %v1656 = vunpack.c.h.b16 %v1328
    %v1657 = vunpack.c.l.b16 %v1329
    %v1658 = vunpack.c.h.b16 %v1329
    %v1659 = vunpack.c.l.b16 %v1330
    %v1660 = vunpack.c.h.b16 %v1330
    %v1661 = vunpack.c.l.b16 %v1331
    %v1662 = vunpack.c.h.b16 %v1331
    %v1663 = vunpack.c.l.b16 %v1332
    %v1664 = vunpack.c.h.b16 %v1332
    %v1665 = vunpack.c.l.b16 %v1333
    %v1666 = vunpack.c.h.b16 %v1333
    %v1667 = vunpack.c.l.b16 %v1334
    %v1668 = vunpack.c.h.b16 %v1334
    %v1669 = vunpack.c.l.b16 %v1335
    %v1670 = vunpack.c.h.b16 %v1335
    %v1671 = vunpack.c.l.b16 %v1336
    %v1672 = vunpack.c.h.b16 %v1336
    %v1673 = vunpack.c.l.b16 %v1337
    %v1674 = vunpack.c.h.b16 %v1337
    %v1675 = vunpack.c.l.b16 %v1338
    %v1676 = vunpack.c.h.b16 %v1338
    %v1677 = vunpack.c.l.b16 %v1339
    %v1678 = vunpack.c.h.b16 %v1339
    %v1679 = vunpack.c.l.b16 %v1340
    %v1680 = vunpack.c.h.b16 %v1340
    %v1681 = vunpack.c.l.b16 %v1341
    %v1682 = vunpack.c.h.b16 %v1341
    %v1683 = vunpack.c.l.b16 %v1342
    %v1684 = vunpack.c.h.b16 %v1342
    %v1685 = vunpack.c.l.b16 %v1343
    %v1686 = vunpack.c.h.b16 %v1343
    %v1687 = vunpack.c.l.b16 %v1344
    %v1688 = vunpack.c.h.b16 %v1344
    %v1689 = vunpack.c.l.b16 %v1345
    %v1690 = vunpack.c.h.b16 %v1345
    %v1691 = vunpack.c.l.b16 %v1346
    %v1692 = vunpack.c.h.b16 %v1346
    %v1693 = vunpack.c.l.b16 %v1347
    %v1694 = vunpack.c.h.b16 %v1347
    %v1695 = vunpack.c.l.b16 %v1348
    %v1696 = vunpack.c.h.b16 %v1348
    %v1697 = vunpack.c.l.b16 %v1349
    %v1698 = vunpack.c.h.b16 %v1349
    %v1699 = vunpack.c.l.b16 %v1350
    %v1700 = vunpack.c.h.b16 %v1350
    %v1701 = vunpack.c.l.b16 %v1351
    %v1702 = vunpack.c.h.b16 %v1351
    %v1703 = vunpack.c.l.b16 %v1352
    %v1704 = vunpack.c.h.b16 %v1352
    %v1705 = vunpack.c.l.b16 %v1353
    %v1706 = vunpack.c.h.b16 %v1353
    %v1707 = vunpack.c.l.b16 %v1354
    %v1708 = vunpack.c.h.b16 %v1354
    %v1709 = vunpack.c.l.b16 %v1355
    %v1710 = vunpack.c.h.b16 %v1355
    %v1711 = vunpack.c.l.b16 %v1356
    %v1712 = vunpack.c.h.b16 %v1356
    %v1713 = vunpack.c.l.b16 %v1357
    %v1714 = vunpack.c.h.b16 %v1357
    %v1715 = vunpack.c.l.b16 %v1358
    %v1716 = vunpack.c.h.b16 %v1358
    %v1717 = vunpack.c.l.b16 %v1359
    %v1718 = vunpack.c.h.b16 %v1359
    %v1719 = vunpack.c.l.b16 %v1360
    %v1720 = vunpack.c.h.b16 %v1360
    %v1721 = vunpack.c.l.b16 %v1361
    %v1722 = vunpack.c.h.b16 %v1361
    %v1723 = vunpack.c.l.b16 %v1362
    %v1724 = vunpack.c.h.b16 %v1362
    %v1725 = vunpack.c.l.b16 %v1363
    %v1726 = vunpack.c.h.b16 %v1363
    %v1727 = vunpack.c.l.b16 %v1364
    %v1728 = vunpack.c.h.b16 %v1364
    %v1729 = vunpack.c.l.b16 %v1365
    %v1730 = vunpack.c.h.b16 %v1365
    %v1731 = vunpack.c.l.b16 %v1366
    %v1732 = vunpack.c.h.b16 %v1366
    %v1733 = vunpack.c.l.b16 %v1367
    %v1734 = vunpack.c.h.b16 %v1367
    %v1735 = vunpack.c.l.b16 %v1368
    %v1736 = vunpack.c.h.b16 %v1368
    %v1737 = vunpack.c.l.b16 %v1369
    %v1738 = vunpack.c.h.b16 %v1369
    %v1739 = vunpack.c.l.b16 %v1370
    %v1740 = vunpack.c.h.b16 %v1370
    %v1741 = vunpack.c.l.b16 %v1371
    %v1742 = vunpack.c.h.b16 %v1371
    %v1743 = vunpack.c.l.b16 %v1372
    %v1744 = vunpack.c.h.b16 %v1372
    %v1745 = vunpack.c.l.b16 %v1373
    %v1746 = vunpack.c.h.b16 %v1373
    %v1747 = vunpack.c.l.b16 %v1374
    %v1748 = vunpack.c.h.b16 %v1374
    %v1749 = vunpack.c.l.b16 %v1375
    %v1750 = vunpack.c.h.b16 %v1375
    %v1751 = vunpack.c.l.b16 %v1376
    %v1752 = vunpack.c.h.b16 %v1376
    %v1753 = vunpack.c.l.b16 %v1377
    %v1754 = vunpack.c.h.b16 %v1377
    %v1755 = vunpack.c.l.b16 %v1378
    %v1756 = vunpack.c.h.b16 %v1378
    %v1757 = vunpack.c.l.b16 %v1379
    %v1758 = vunpack.c.h.b16 %v1379
    %v1759 = vunpack.c.l.b16 %v1380
    %v1760 = vunpack.c.h.b16 %v1380
    %v1761 = vunpack.c.l.b16 %v1381
    %v1762 = vunpack.c.h.b16 %v1381
    %v1763 = vunpack.c.l.b16 %v1382
    %v1764 = vunpack.c.h.b16 %v1382
    %v1765 = vunpack.c.l.b16 %v1383
    %v1766 = vunpack.c.h.b16 %v1383
    %v1767 = vunpack.c.l.b16 %v1384
    %v1768 = vunpack.c.h.b16 %v1384
    %v1769 = vunpack.c.l.b16 %v1385
    %v1770 = vunpack.c.h.b16 %v1385
    %v1771 = vunpack.c.l.b16 %v1386
    %v1772 = vunpack.c.h.b16 %v1386
    %v1773 = vunpack.c.l.b16 %v1387
    %v1774 = vunpack.c.h.b16 %v1387
    %v1775 = vunpack.c.l.b16 %v1388
    %v1776 = vunpack.c.h.b16 %v1388
    %v1777 = vunpack.c.l.b16 %v1389
    %v1778 = vunpack.c.h.b16 %v1389
    %v1779 = vunpack.c.l.b16 %v1390
    %v1780 = vunpack.c.h.b16 %v1390
    %v1781 = vunpack.c.l.b16 %v1391
    %v1782 = vunpack.c.h.b16 %v1391
    %v1783 = vunpack.c.l.b16 %v1392
    %v1784 = vunpack.c.h.b16 %v1392
    %v1785 = vunpack.c.l.b16 %v1393
    %v1786 = vunpack.c.h.b16 %v1393
    %v1787 = vunpack.c.l.b16 %v1394
    %v1788 = vunpack.c.h.b16 %v1394
    %v1789 = vpack.c.b16 %v1537, %v1533
    %v1790 = vpack.c.b16 %v1538, %v1534
    %v1791 = vpack.c.b16 %v1539, %v1535
    %v1792 = vpack.c.b16 %v1540, %v1536
    %v1793 = vpack.c.b16 %v1545, %v1541
    %v1794 = vpack.c.b16 %v1546, %v1542
    %v1795 = vpack.c.b16 %v1547, %v1543
    %v1796 = vpack.c.b16 %v1548, %v1544
    %v1797 = vpack.c.b16 %v1553, %v1549
    %v1798 = vpack.c.b16 %v1554, %v1550
    %v1799 = vpack.c.b16 %v1555, %v1551
    %v1800 = vpack.c.b16 %v1556, %v1552
    %v1801 = vpack.c.b16 %v1561, %v1557
    %v1802 = vpack.c.b16 %v1562, %v1558
    %v1803 = vpack.c.b16 %v1563, %v1559
    %v1804 = vpack.c.b16 %v1564, %v1560
    %v1805 = vpack.c.b16 %v1569, %v1565
    %v1806 = vpack.c.b16 %v1570, %v1566
    %v1807 = vpack.c.b16 %v1571, %v1567
    %v1808 = vpack.c.b16 %v1572, %v1568
    %v1809 = vpack.c.b16 %v1577, %v1573
    %v1810 = vpack.c.b16 %v1578, %v1574
    %v1811 = vpack.c.b16 %v1579, %v1575
    %v1812 = vpack.c.b16 %v1580, %v1576
    %v1813 = vpack.c.b16 %v1585, %v1581
    %v1814 = vpack.c.b16 %v1586, %v1582
    %v1815 = vpack.c.b16 %v1587, %v1583
    %v1816 = vpack.c.b16 %v1588, %v1584
    %v1817 = vpack.c.b16 %v1593, %v1589
    %v1818 = vpack.c.b16 %v1594, %v1590
    %v1819 = vpack.c.b16 %v1595, %v1591
    %v1820 = vpack.c.b16 %v1596, %v1592
    %v1821 = vpack.c.b16 %v1601, %v1597
    %v1822 = vpack.c.b16 %v1602, %v1598
    %v1823 = vpack.c.b16 %v1603, %v1599
    %v1824 = vpack.c.b16 %v1604, %v1600
    %v1825 = vpack.c.b16 %v1609, %v1605
    %v1826 = vpack.c.b16 %v1610, %v1606
    %v1827 = vpack.c.b16 %v1611, %v1607
    %v1828 = vpack.c.b16 %v1612, %v1608
    %v1829 = vpack.c.b16 %v1617, %v1613
    %v1830 = vpack.c.b16 %v1618, %v1614
    %v1831 = vpack.c.b16 %v1619, %v1615
    %v1832 = vpack.c.b16 %v1620, %v1616
    %v1833 = vpack.c.b16 %v1625, %v1621
    %v1834 = vpack.c.b16 %v1626, %v1622
    %v1835 = vpack.c.b16 %v1627, %v1623
    %v1836 = vpack.c.b16 %v1628, %v1624
    %v1837 = vpack.c.b16 %v1633, %v1629
    %v1838 = vpack.c.b16 %v1634, %v1630
    %v1839 = vpack.c.b16 %v1635, %v1631
    %v1840 = vpack.c.b16 %v1636, %v1632
    %v1841 = vpack.c.b16 %v1641, %v1637
    %v1842 = vpack.c.b16 %v1642, %v1638
    %v1843 = vpack.c.b16 %v1643, %v1639
    %v1844 = vpack.c.b16 %v1644, %v1640
    %v1845 = vpack.c.b16 %v1649, %v1645
    %v1846 = vpack.c.b16 %v1650, %v1646
    %v1847 = vpack.c.b16 %v1651, %v1647
    %v1848 = vpack.c.b16 %v1652, %v1648
    %v1849 = vpack.c.b16 %v1657, %v1653
    %v1850 = vpack.c.b16 %v1658, %v1654
    %v1851 = vpack.c.b16 %v1659, %v1655
    %v1852 = vpack.c.b16 %v1660, %v1656
    %v1853 = vpack.c.b16 %v1665, %v1661
    %v1854 = vpack.c.b16 %v1666, %v1662
    %v1855 = vpack.c.b16 %v1667, %v1663
    %v1856 = vpack.c.b16 %v1668, %v1664
    %v1857 = vpack.c.b16 %v1673, %v1669
    %v1858 = vpack.c.b16 %v1674, %v1670
    %v1859 = vpack.c.b16 %v1675, %v1671
    %v1860 = vpack.c.b16 %v1676, %v1672
    %v1861 = vpack.c.b16 %v1681, %v1677
    %v1862 = vpack.c.b16 %v1682, %v1678
    %v1863 = vpack.c.b16 %v1683, %v1679
    %v1864 = vpack.c.b16 %v1684, %v1680
    %v1865 = vpack.c.b16 %v1689, %v1685
    %v1866 = vpack.c.b16 %v1690, %v1686
    %v1867 = vpack.c.b16 %v1691, %v1687
    %v1868 = vpack.c.b16 %v1692, %v1688
    %v1869 = vpack.c.b16 %v1697, %v1693
    %v1870 = vpack.c.b16 %v1698, %v1694
    %v1871 = vpack.c.b16 %v1699, %v1695
    %v1872 = vpack.c.b16 %v1700, %v1696
    %v1873 = vpack.c.b16 %v1705, %v1701
    %v1874 = vpack.c.b16 %v1706, %v1702
    %v1875 = vpack.c.b16 %v1707, %v1703
    %v1876 = vpack.c.b16 %v1708, %v1704
    %v1877 = vpack.c.b16 %v1713, %v1709
    %v1878 = vpack.c.b16 %v1714, %v1710
    %v1879 = vpack.c.b16 %v1715, %v1711
    %v1880 = vpack.c.b16 %v1716, %v1712
    %v1881 = vpack.c.b16 %v1721, %v1717
    %v1882 = vpack.c.b16 %v1722, %v1718
    %v1883 = vpack.c.b16 %v1723, %v1719
    %v1884 = vpack.c.b16 %v1724, %v1720
    %v1885 = vpack.c.b16 %v1729, %v1725
    %v1886 = vpack.c.b16 %v1730, %v1726
    %v1887 = vpack.c.b16 %v1731, %v1727
    %v1888 = vpack.c.b16 %v1732, %v1728
    %v1889 = vpack.c.b16 %v1737, %v1733
    %v1890 = vpack.c.b16 %v1738, %v1734
    %v1891 = vpack.c.b16 %v1739, %v1735
    %v1892 = vpack.c.b16 %v1740, %v1736
    %v1893 = vpack.c.b16 %v1745, %v1741
    %v1894 = vpack.c.b16 %v1746, %v1742
    %v1895 = vpack.c.b16 %v1747, %v1743
    %v1896 = vpack.c.b16 %v1748, %v1744
    %v1897 = vpack.c.b16 %v1753, %v1749
    %v1898 = vpack.c.b16 %v1754, %v1750
    %v1899 = vpack.c.b16 %v1755, %v1751
    %v1900 = vpack.c.b16 %v1756, %v1752
    %v1901 = vpack.c.b16 %v1761, %v1757
    %v1902 = vpack.c.b16 %v1762, %v1758
    %v1903 = vpack.c.b16 %v1763, %v1759
    %v1904 = vpack.c.b16 %v1764, %v1760
    %v1905 = vpack.c.b16 %v1769, %v1765
    %v1906 = vpack.c.b16 %v1770, %v1766
    %v1907 = vpack.c.b16 %v1771, %v1767
    %v1908 = vpack.c.b16 %v1772, %v1768
    %v1909 = vpack.c.b16 %v1777, %v1773
    %v1910 = vpack.c.b16 %v1778, %v1774
    %v1911 = vpack.c.b16 %v1779, %v1775
    %v1912 = vpack.c.b16 %v1780, %v1776
    %v1913 = vpack.c.b16 %v1785, %v1781
    %v1914 = vpack.c.b16 %v1786, %v1782
    %v1915 = vpack.c.b16 %v1787, %v1783
    %v1916 = vpack.c.b16 %v1788, %v1784
    %2045 = vmatpush.bf16.msra.mxu0 %v1817
    %2046 = vmatpush.bf16.msra.mxu0 %v1813
    %2047 = vmatpush.bf16.msra.mxu0 %v1809
    %2048 = vmatpush.bf16.msra.mxu0 %v1805
    %2049 = vmatpush.bf16.msra.mxu0 %v1801
    %2050 = vmatpush.bf16.msra.mxu0 %v1797
    %2051 = vmatpush.bf16.msra.mxu0 %v1793
    %2052 = vmatpush.bf16.msra.mxu0 %v1789
    %2053 = vmatmul.bf16.gmra.mxu0 %v1263
    %v2054 = vpop.f32.mrf.mxu0
    %v2055 = vadd.f32 %v1397, %v2054
    %v2056 = vpop.f32.mrf.mxu0
    %2057 = vdwg.mxu0
    %2058 = vmatpush.bf16.msra.mxu0 %v1849
    %2059 = vmatpush.bf16.msra.mxu0 %v1845
    %2060 = vmatpush.bf16.msra.mxu0 %v1841
    %2061 = vmatpush.bf16.msra.mxu0 %v1837
    %2062 = vmatpush.bf16.msra.mxu0 %v1833
    %2063 = vmatpush.bf16.msra.mxu0 %v1829
    %2064 = vmatpush.bf16.msra.mxu0 %v1825
    %2065 = vmatpush.bf16.msra.mxu0 %v1821
    %2066 = vmatmul.bf16.gmra.mxu0 %v1264
    %v2067 = vpop.f32.mrf.mxu0
    %v2068 = vadd.f32 %v2055, %v2067
    %v2069 = vpop.f32.mrf.mxu0
    %2070 = vdwg.mxu0
    %2071 = vmatpush.bf16.msra.mxu0 %v1881
    %2072 = vmatpush.bf16.msra.mxu0 %v1877
    %2073 = vmatpush.bf16.msra.mxu0 %v1873
    %2074 = vmatpush.bf16.msra.mxu0 %v1869
    %2075 = vmatpush.bf16.msra.mxu0 %v1865
    %2076 = vmatpush.bf16.msra.mxu0 %v1861
    %2077 = vmatpush.bf16.msra.mxu0 %v1857
    %2078 = vmatpush.bf16.msra.mxu0 %v1853
    %2079 = vmatmul.bf16.gmra.mxu0 %v1265
    %v2080 = vpop.f32.mrf.mxu0
    %v2081 = vadd.f32 %v2068, %v2080
    %v2082 = vpop.f32.mrf.mxu0
    %2083 = vdwg.mxu0
    %2084 = vmatpush.bf16.msra.mxu0 %v1913
    %2085 = vmatpush.bf16.msra.mxu0 %v1909
    %2086 = vmatpush.bf16.msra.mxu0 %v1905
    %2087 = vmatpush.bf16.msra.mxu0 %v1901
    %2088 = vmatpush.bf16.msra.mxu0 %v1897
    %2089 = vmatpush.bf16.msra.mxu0 %v1893
    %2090 = vmatpush.bf16.msra.mxu0 %v1889
    %2091 = vmatpush.bf16.msra.mxu0 %v1885
    %2092 = vmatmul.bf16.gmra.mxu0 %v1266
    %v2093 = vpop.f32.mrf.mxu0
    %v2094 = vadd.f32 %v2081, %v2093
    %v2095 = vpop.f32.mrf.mxu0
    %2096 = vdwg.mxu0
    %2097 = vmatpush.bf16.msra.mxu0 %v1818
    %2098 = vmatpush.bf16.msra.mxu0 %v1814
    %2099 = vmatpush.bf16.msra.mxu0 %v1810
    %2100 = vmatpush.bf16.msra.mxu0 %v1806
    %2101 = vmatpush.bf16.msra.mxu0 %v1802
    %2102 = vmatpush.bf16.msra.mxu0 %v1798
    %2103 = vmatpush.bf16.msra.mxu0 %v1794
    %2104 = vmatpush.bf16.msra.mxu0 %v1790
    %2105 = vmatmul.bf16.gmra.mxu0 %v1263
    %v2106 = vpop.f32.mrf.mxu0
    %v2107 = vadd.f32 %v1398, %v2106
    %v2108 = vpop.f32.mrf.mxu0
    %2109 = vdwg.mxu0
    %2110 = vmatpush.bf16.msra.mxu0 %v1850
    %2111 = vmatpush.bf16.msra.mxu0 %v1846
    %2112 = vmatpush.bf16.msra.mxu0 %v1842
    %2113 = vmatpush.bf16.msra.mxu0 %v1838
    %2114 = vmatpush.bf16.msra.mxu0 %v1834
    %2115 = vmatpush.bf16.msra.mxu0 %v1830
    %2116 = vmatpush.bf16.msra.mxu0 %v1826
    %2117 = vmatpush.bf16.msra.mxu0 %v1822
    %2118 = vmatmul.bf16.gmra.mxu0 %v1264
    %v2119 = vpop.f32.mrf.mxu0
    %v2120 = vadd.f32 %v2107, %v2119
    %v2121 = vpop.f32.mrf.mxu0
    %2122 = vdwg.mxu0
    %2123 = vmatpush.bf16.msra.mxu0 %v1882
    %2124 = vmatpush.bf16.msra.mxu0 %v1878
    %2125 = vmatpush.bf16.msra.mxu0 %v1874
    %2126 = vmatpush.bf16.msra.mxu0 %v1870
    %2127 = vmatpush.bf16.msra.mxu0 %v1866
    %2128 = vmatpush.bf16.msra.mxu0 %v1862
    %2129 = vmatpush.bf16.msra.mxu0 %v1858
    %2130 = vmatpush.bf16.msra.mxu0 %v1854
    %2131 = vmatmul.bf16.gmra.mxu0 %v1265
    %v2132 = vpop.f32.mrf.mxu0
    %v2133 = vadd.f32 %v2120, %v2132
    %v2134 = vpop.f32.mrf.mxu0
    %2135 = vdwg.mxu0
    %2136 = vmatpush.bf16.msra.mxu0 %v1914
    %2137 = vmatpush.bf16.msra.mxu0 %v1910
    %2138 = vmatpush.bf16.msra.mxu0 %v1906
    %2139 = vmatpush.bf16.msra.mxu0 %v1902
    %2140 = vmatpush.bf16.msra.mxu0 %v1898
    %2141 = vmatpush.bf16.msra.mxu0 %v1894
    %2142 = vmatpush.bf16.msra.mxu0 %v1890
    %2143 = vmatpush.bf16.msra.mxu0 %v1886
    %2144 = vmatmul.bf16.gmra.mxu0 %v1266
    %v2145 = vpop.f32.mrf.mxu0
    %v2146 = vadd.f32 %v2133, %v2145
    %v2147 = vpop.f32.mrf.mxu0
    %2148 = vdwg.mxu0
    %2149 = vmatpush.bf16.msra.mxu0 %v1819
    %2150 = vmatpush.bf16.msra.mxu0 %v1815
    %2151 = vmatpush.bf16.msra.mxu0 %v1811
    %2152 = vmatpush.bf16.msra.mxu0 %v1807
    %2153 = vmatpush.bf16.msra.mxu0 %v1803
    %2154 = vmatpush.bf16.msra.mxu0 %v1799
    %2155 = vmatpush.bf16.msra.mxu0 %v1795
    %2156 = vmatpush.bf16.msra.mxu0 %v1791
    %2157 = vmatmul.bf16.gmra.mxu0 %v1263
    %v2158 = vpop.f32.mrf.mxu0
    %v2159 = vadd.f32 %v1399, %v2158
    %v2160 = vpop.f32.mrf.mxu0
    %2161 = vdwg.mxu0
    %2162 = vmatpush.bf16.msra.mxu0 %v1851
    %2163 = vmatpush.bf16.msra.mxu0 %v1847
    %2164 = vmatpush.bf16.msra.mxu0 %v1843
    %2165 = vmatpush.bf16.msra.mxu0 %v1839
    %2166 = vmatpush.bf16.msra.mxu0 %v1835
    %2167 = vmatpush.bf16.msra.mxu0 %v1831
    %2168 = vmatpush.bf16.msra.mxu0 %v1827
    %2169 = vmatpush.bf16.msra.mxu0 %v1823
    %2170 = vmatmul.bf16.gmra.mxu0 %v1264
    %v2171 = vpop.f32.mrf.mxu0
    %v2172 = vadd.f32 %v2159, %v2171
    %v2173 = vpop.f32.mrf.mxu0
    %2174 = vdwg.mxu0
    %2175 = vmatpush.bf16.msra.mxu0 %v1883
    %2176 = vmatpush.bf16.msra.mxu0 %v1879
    %2177 = vmatpush.bf16.msra.mxu0 %v1875
    %2178 = vmatpush.bf16.msra.mxu0 %v1871
    %2179 = vmatpush.bf16.msra.mxu0 %v1867
    %2180 = vmatpush.bf16.msra.mxu0 %v1863
    %2181 = vmatpush.bf16.msra.mxu0 %v1859
    %2182 = vmatpush.bf16.msra.mxu0 %v1855
    %2183 = vmatmul.bf16.gmra.mxu0 %v1265
    %v2184 = vpop.f32.mrf.mxu0
    %v2185 = vadd.f32 %v2172, %v2184
    %v2186 = vpop.f32.mrf.mxu0
    %2187 = vdwg.mxu0
    %2188 = vmatpush.bf16.msra.mxu0 %v1915
    %2189 = vmatpush.bf16.msra.mxu0 %v1911
    %2190 = vmatpush.bf16.msra.mxu0 %v1907
    %2191 = vmatpush.bf16.msra.mxu0 %v1903
    %2192 = vmatpush.bf16.msra.mxu0 %v1899
    %2193 = vmatpush.bf16.msra.mxu0 %v1895
    %2194 = vmatpush.bf16.msra.mxu0 %v1891
    %2195 = vmatpush.bf16.msra.mxu0 %v1887
    %2196 = vmatmul.bf16.gmra.mxu0 %v1266
    %v2197 = vpop.f32.mrf.mxu0
    %v2198 = vadd.f32 %v2185, %v2197
    %v2199 = vpop.f32.mrf.mxu0
    %2200 = vdwg.mxu0
    %2201 = vmatpush.bf16.msra.mxu0 %v1820
    %2202 = vmatpush.bf16.msra.mxu0 %v1816
    %2203 = vmatpush.bf16.msra.mxu0 %v1812
    %2204 = vmatpush.bf16.msra.mxu0 %v1808
    %2205 = vmatpush.bf16.msra.mxu0 %v1804
    %2206 = vmatpush.bf16.msra.mxu0 %v1800
    %2207 = vmatpush.bf16.msra.mxu0 %v1796
    %2208 = vmatpush.bf16.msra.mxu0 %v1792
    %2209 = vmatmul.bf16.gmra.mxu0 %v1263
    %v2210 = vpop.f32.mrf.mxu0
    %v2211 = vadd.f32 %v1400, %v2210
    %v2212 = vpop.f32.mrf.mxu0
    %2213 = vdwg.mxu0
    %2214 = vmatpush.bf16.msra.mxu0 %v1852
    %2215 = vmatpush.bf16.msra.mxu0 %v1848
    %2216 = vmatpush.bf16.msra.mxu0 %v1844
    %2217 = vmatpush.bf16.msra.mxu0 %v1840
    %2218 = vmatpush.bf16.msra.mxu0 %v1836
    %2219 = vmatpush.bf16.msra.mxu0 %v1832
    %2220 = vmatpush.bf16.msra.mxu0 %v1828
    %2221 = vmatpush.bf16.msra.mxu0 %v1824
    %2222 = vmatmul.bf16.gmra.mxu0 %v1264
    %v2223 = vpop.f32.mrf.mxu0
    %v2224 = vadd.f32 %v2211, %v2223
    %v2225 = vpop.f32.mrf.mxu0
    %2226 = vdwg.mxu0
    %2227 = vmatpush.bf16.msra.mxu0 %v1884
    %2228 = vmatpush.bf16.msra.mxu0 %v1880
    %2229 = vmatpush.bf16.msra.mxu0 %v1876
    %2230 = vmatpush.bf16.msra.mxu0 %v1872
    %2231 = vmatpush.bf16.msra.mxu0 %v1868
    %2232 = vmatpush.bf16.msra.mxu0 %v1864
    %2233 = vmatpush.bf16.msra.mxu0 %v1860
    %2234 = vmatpush.bf16.msra.mxu0 %v1856
    %2235 = vmatmul.bf16.gmra.mxu0 %v1265
    %v2236 = vpop.f32.mrf.mxu0
    %v2237 = vadd.f32 %v2224, %v2236
    %v2238 = vpop.f32.mrf.mxu0
    %2239 = vdwg.mxu0
    %2240 = vmatpush.bf16.msra.mxu0 %v1916
    %2241 = vmatpush.bf16.msra.mxu0 %v1912
    %2242 = vmatpush.bf16.msra.mxu0 %v1908
    %2243 = vmatpush.bf16.msra.mxu0 %v1904
    %2244 = vmatpush.bf16.msra.mxu0 %v1900
    %2245 = vmatpush.bf16.msra.mxu0 %v1896
    %2246 = vmatpush.bf16.msra.mxu0 %v1892
    %2247 = vmatpush.bf16.msra.mxu0 %v1888
    %2248 = vmatmul.bf16.gmra.mxu0 %v1266
    %v2249 = vpop.f32.mrf.mxu0
    %v2250 = vadd.f32 %v2237, %v2249
    %v2251 = vpop.f32.mrf.mxu0
    %2252 = vdwg.mxu0
    %v2253 = vpack.c.bf16 %v2146, %v2094
    %v2254 = vpack.c.bf16 %v2250, %v2198
    %v2255 = vunpack.c.l.bf16 %v2253
    %v2256 = vunpack.c.h.bf16 %v2253
    %v2257 = vunpack.c.l.bf16 %v2254
    %v2258 = vunpack.c.h.bf16 %v2254
    %v2259 = vmax.f32 %v2255, 0.0
    %v2260 = vmax.f32 %v2256, 0.0
    %v2261 = vmax.f32 %v2257, 0.0
    %v2262 = vmax.f32 %v2258, 0.0
    %v2263 = vpack.c.bf16 %v2259, %v2259
    %v2264 = vpack.c.bf16 %v2260, %v2260
    %v2265 = vpack.c.bf16 %v2261, %v2261
    %v2266 = vpack.c.bf16 %v2262, %v2262
    %v2267 = vld [vmem:[#allocation13] sm:$0xf]
    %v2268 = vld [vmem:[#allocation13 + $0x4] sm:$0xf]
    %v2269 = vld [vmem:[#allocation13 + $0x8] sm:$0xf]
    %v2270 = vld [vmem:[#allocation13 + $0xc] sm:$0xf]
    %v2271 = vld [vmem:[#allocation13 + $0x10] sm:$0xf]
    %v2272 = vld [vmem:[#allocation13 + $0x14] sm:$0xf]
    %v2273 = vld [vmem:[#allocation13 + $0x18] sm:$0xf]
    %v2274 = vld [vmem:[#allocation13 + $0x1c] sm:$0xf]
    %v2275 = vld [vmem:[#allocation13 + $0x20] sm:$0xf]
    %v2276 = vld [vmem:[#allocation13 + $0x24] sm:$0xf]
    %v2277 = vld [vmem:[#allocation13 + $0x28] sm:$0xf]
    %v2278 = vld [vmem:[#allocation13 + $0x2c] sm:$0xf]
    %v2279 = vld [vmem:[#allocation13 + $0x30] sm:$0xf]
    %v2280 = vld [vmem:[#allocation13 + $0x34] sm:$0xf]
    %v2281 = vld [vmem:[#allocation13 + $0x38] sm:$0xf]
    %v2282 = vld [vmem:[#allocation13 + $0x3c] sm:$0xf]
    %v2283 = vld [vmem:[#allocation13 + $0x40] sm:$0xf]
    %v2284 = vld [vmem:[#allocation13 + $0x44] sm:$0xf]
    %v2285 = vld [vmem:[#allocation13 + $0x48] sm:$0xf]
    %v2286 = vld [vmem:[#allocation13 + $0x4c] sm:$0xf]
    %v2287 = vld [vmem:[#allocation13 + $0x50] sm:$0xf]
    %v2288 = vld [vmem:[#allocation13 + $0x54] sm:$0xf]
    %v2289 = vld [vmem:[#allocation13 + $0x58] sm:$0xf]
    %v2290 = vld [vmem:[#allocation13 + $0x5c] sm:$0xf]
    %v2291 = vld [vmem:[#allocation13 + $0x60] sm:$0xf]
    %v2292 = vld [vmem:[#allocation13 + $0x64] sm:$0xf]
    %v2293 = vld [vmem:[#allocation13 + $0x68] sm:$0xf]
    %v2294 = vld [vmem:[#allocation13 + $0x6c] sm:$0xf]
    %v2295 = vld [vmem:[#allocation13 + $0x70] sm:$0xf]
    %v2296 = vld [vmem:[#allocation13 + $0x74] sm:$0xf]
    %v2297 = vld [vmem:[#allocation13 + $0x78] sm:$0xf]
    %v2298 = vld [vmem:[#allocation13 + $0x7c] sm:$0xf]
    %v2299 = vld [vmem:[#allocation13 + $0x80] sm:$0xf]
    %v2300 = vld [vmem:[#allocation13 + $0x84] sm:$0xf]
    %v2301 = vld [vmem:[#allocation13 + $0x88] sm:$0xf]
    %v2302 = vld [vmem:[#allocation13 + $0x8c] sm:$0xf]
    %v2303 = vld [vmem:[#allocation13 + $0x90] sm:$0xf]
    %v2304 = vld [vmem:[#allocation13 + $0x94] sm:$0xf]
    %v2305 = vld [vmem:[#allocation13 + $0x98] sm:$0xf]
    %v2306 = vld [vmem:[#allocation13 + $0x9c] sm:$0xf]
    %v2307 = vld [vmem:[#allocation13 + $0xa0] sm:$0xf]
    %v2308 = vld [vmem:[#allocation13 + $0xa4] sm:$0xf]
    %v2309 = vld [vmem:[#allocation13 + $0xa8] sm:$0xf]
    %v2310 = vld [vmem:[#allocation13 + $0xac] sm:$0xf]
    %v2311 = vld [vmem:[#allocation13 + $0xb0] sm:$0xf]
    %v2312 = vld [vmem:[#allocation13 + $0xb4] sm:$0xf]
    %v2313 = vld [vmem:[#allocation13 + $0xb8] sm:$0xf]
    %v2314 = vld [vmem:[#allocation13 + $0xbc] sm:$0xf]
    %v2315 = vld [vmem:[#allocation13 + $0xc0] sm:$0xf]
    %v2316 = vld [vmem:[#allocation13 + $0xc4] sm:$0xf]
    %v2317 = vld [vmem:[#allocation13 + $0xc8] sm:$0xf]
    %v2318 = vld [vmem:[#allocation13 + $0xcc] sm:$0xf]
    %v2319 = vld [vmem:[#allocation13 + $0xd0] sm:$0xf]
    %v2320 = vld [vmem:[#allocation13 + $0xd4] sm:$0xf]
    %v2321 = vld [vmem:[#allocation13 + $0xd8] sm:$0xf]
    %v2322 = vld [vmem:[#allocation13 + $0xdc] sm:$0xf]
    %v2323 = vld [vmem:[#allocation13 + $0xe0] sm:$0xf]
    %v2324 = vld [vmem:[#allocation13 + $0xe4] sm:$0xf]
    %v2325 = vld [vmem:[#allocation13 + $0xe8] sm:$0xf]
    %v2326 = vld [vmem:[#allocation13 + $0xec] sm:$0xf]
    %v2327 = vld [vmem:[#allocation13 + $0xf0] sm:$0xf]
    %v2328 = vld [vmem:[#allocation13 + $0xf4] sm:$0xf]
    %v2329 = vld [vmem:[#allocation13 + $0xf8] sm:$0xf]
    %v2330 = vld [vmem:[#allocation13 + $0xfc] sm:$0xf]
    %v2331 = vld [vmem:[%s8] sm:$0x1]
    %v2333 = vperm.slane %v2331, 0
    %v2399 = vunpack.c.l.b16 %v2267
    %v2400 = vunpack.c.l.b16 %v2268
    %v2401 = vunpack.c.l.b16 %v2269
    %v2402 = vunpack.c.l.b16 %v2270
    %v2403 = vunpack.c.l.b16 %v2271
    %v2404 = vunpack.c.l.b16 %v2272
    %v2405 = vunpack.c.l.b16 %v2273
    %v2406 = vunpack.c.l.b16 %v2274
    %v2407 = vunpack.c.l.b16 %v2275
    %v2408 = vunpack.c.l.b16 %v2276
    %v2409 = vunpack.c.l.b16 %v2277
    %v2410 = vunpack.c.l.b16 %v2278
    %v2411 = vunpack.c.l.b16 %v2279
    %v2412 = vunpack.c.l.b16 %v2280
    %v2413 = vunpack.c.l.b16 %v2281
    %v2414 = vunpack.c.l.b16 %v2282
    %v2415 = vunpack.c.l.b16 %v2283
    %v2416 = vunpack.c.l.b16 %v2284
    %v2417 = vunpack.c.l.b16 %v2285
    %v2418 = vunpack.c.l.b16 %v2286
    %v2419 = vunpack.c.l.b16 %v2287
    %v2420 = vunpack.c.l.b16 %v2288
    %v2421 = vunpack.c.l.b16 %v2289
    %v2422 = vunpack.c.l.b16 %v2290
    %v2423 = vunpack.c.l.b16 %v2291
    %v2424 = vunpack.c.l.b16 %v2292
    %v2425 = vunpack.c.l.b16 %v2293
    %v2426 = vunpack.c.l.b16 %v2294
    %v2427 = vunpack.c.l.b16 %v2295
    %v2428 = vunpack.c.l.b16 %v2296
    %v2429 = vunpack.c.l.b16 %v2297
    %v2430 = vunpack.c.l.b16 %v2298
    %v2431 = vunpack.c.l.b16 %v2299
    %v2432 = vunpack.c.l.b16 %v2300
    %v2433 = vunpack.c.l.b16 %v2301
    %v2434 = vunpack.c.l.b16 %v2302
    %v2435 = vunpack.c.l.b16 %v2303
    %v2436 = vunpack.c.l.b16 %v2304
    %v2437 = vunpack.c.l.b16 %v2305
    %v2438 = vunpack.c.l.b16 %v2306
    %v2439 = vunpack.c.l.b16 %v2307
    %v2440 = vunpack.c.l.b16 %v2308
    %v2441 = vunpack.c.l.b16 %v2309
    %v2442 = vunpack.c.l.b16 %v2310
    %v2443 = vunpack.c.l.b16 %v2311
    %v2444 = vunpack.c.l.b16 %v2312
    %v2445 = vunpack.c.l.b16 %v2313
    %v2446 = vunpack.c.l.b16 %v2314
    %v2447 = vunpack.c.l.b16 %v2315
    %v2448 = vunpack.c.l.b16 %v2316
    %v2449 = vunpack.c.l.b16 %v2317
    %v2450 = vunpack.c.l.b16 %v2318
    %v2451 = vunpack.c.l.b16 %v2319
    %v2452 = vunpack.c.l.b16 %v2320
    %v2453 = vunpack.c.l.b16 %v2321
    %v2454 = vunpack.c.l.b16 %v2322
    %v2455 = vunpack.c.l.b16 %v2323
    %v2456 = vunpack.c.l.b16 %v2324
    %v2457 = vunpack.c.l.b16 %v2325
    %v2458 = vunpack.c.l.b16 %v2326
    %v2459 = vunpack.c.l.b16 %v2327
    %v2460 = vunpack.c.l.b16 %v2328
    %v2461 = vunpack.c.l.b16 %v2329
    %v2462 = vunpack.c.l.b16 %v2330
    %v2463 = vpack.c.b16 %v2400, %v2399
    %v2464 = vpack.c.b16 %v2402, %v2401
    %v2465 = vpack.c.b16 %v2404, %v2403
    %v2466 = vpack.c.b16 %v2406, %v2405
    %v2467 = vpack.c.b16 %v2408, %v2407
    %v2468 = vpack.c.b16 %v2410, %v2409
    %v2469 = vpack.c.b16 %v2412, %v2411
    %v2470 = vpack.c.b16 %v2414, %v2413
    %v2471 = vpack.c.b16 %v2416, %v2415
    %v2472 = vpack.c.b16 %v2418, %v2417
    %v2473 = vpack.c.b16 %v2420, %v2419
    %v2474 = vpack.c.b16 %v2422, %v2421
    %v2475 = vpack.c.b16 %v2424, %v2423
    %v2476 = vpack.c.b16 %v2426, %v2425
    %v2477 = vpack.c.b16 %v2428, %v2427
    %v2478 = vpack.c.b16 %v2430, %v2429
    %v2479 = vpack.c.b16 %v2432, %v2431
    %v2480 = vpack.c.b16 %v2434, %v2433
    %v2481 = vpack.c.b16 %v2436, %v2435
    %v2482 = vpack.c.b16 %v2438, %v2437
    %v2483 = vpack.c.b16 %v2440, %v2439
    %v2484 = vpack.c.b16 %v2442, %v2441
    %v2485 = vpack.c.b16 %v2444, %v2443
    %v2486 = vpack.c.b16 %v2446, %v2445
    %v2487 = vpack.c.b16 %v2448, %v2447
    %v2488 = vpack.c.b16 %v2450, %v2449
    %v2489 = vpack.c.b16 %v2452, %v2451
    %v2490 = vpack.c.b16 %v2454, %v2453
    %v2491 = vpack.c.b16 %v2456, %v2455
    %v2492 = vpack.c.b16 %v2458, %v2457
    %v2493 = vpack.c.b16 %v2460, %v2459
    %v2494 = vpack.c.b16 %v2462, %v2461
    %2527 = vmatpush.bf16.msra.mxu0 %v2470
    %2528 = vmatpush.bf16.msra.mxu0 %v2469
    %2529 = vmatpush.bf16.msra.mxu0 %v2468
    %2530 = vmatpush.bf16.msra.mxu0 %v2467
    %2531 = vmatpush.bf16.msra.mxu0 %v2466
    %2532 = vmatpush.bf16.msra.mxu0 %v2465
    %2533 = vmatpush.bf16.msra.mxu0 %v2464
    %2534 = vmatpush.bf16.msra.mxu0 %v2463
    %2535 = vmatmul.bf16.gmra.mxu0 %v2263
    %v2536 = vpop.f32.mrf.mxu0
    %v2537 = vadd.f32 %v2333, %v2536
    %v2538 = vpop.f32.mrf.mxu0
    %2539 = vdwg.mxu0
    %2540 = vmatpush.bf16.msra.mxu0 %v2478
    %2541 = vmatpush.bf16.msra.mxu0 %v2477
    %2542 = vmatpush.bf16.msra.mxu0 %v2476
    %2543 = vmatpush.bf16.msra.mxu0 %v2475
    %2544 = vmatpush.bf16.msra.mxu0 %v2474
    %2545 = vmatpush.bf16.msra.mxu0 %v2473
    %2546 = vmatpush.bf16.msra.mxu0 %v2472
    %2547 = vmatpush.bf16.msra.mxu0 %v2471
    %2548 = vmatmul.bf16.gmra.mxu0 %v2264
    %v2549 = vpop.f32.mrf.mxu0
    %v2550 = vadd.f32 %v2537, %v2549
    %v2551 = vpop.f32.mrf.mxu0
    %2552 = vdwg.mxu0
    %2553 = vmatpush.bf16.msra.mxu0 %v2486
    %2554 = vmatpush.bf16.msra.mxu0 %v2485
    %2555 = vmatpush.bf16.msra.mxu0 %v2484
    %2556 = vmatpush.bf16.msra.mxu0 %v2483
    %2557 = vmatpush.bf16.msra.mxu0 %v2482
    %2558 = vmatpush.bf16.msra.mxu0 %v2481
    %2559 = vmatpush.bf16.msra.mxu0 %v2480
    %2560 = vmatpush.bf16.msra.mxu0 %v2479
    %2561 = vmatmul.bf16.gmra.mxu0 %v2265
    %v2562 = vpop.f32.mrf.mxu0
    %v2563 = vadd.f32 %v2550, %v2562
    %v2564 = vpop.f32.mrf.mxu0
    %2565 = vdwg.mxu0
    %2566 = vmatpush.bf16.msra.mxu0 %v2494
    %2567 = vmatpush.bf16.msra.mxu0 %v2493
    %2568 = vmatpush.bf16.msra.mxu0 %v2492
    %2569 = vmatpush.bf16.msra.mxu0 %v2491
    %2570 = vmatpush.bf16.msra.mxu0 %v2490
    %2571 = vmatpush.bf16.msra.mxu0 %v2489
    %2572 = vmatpush.bf16.msra.mxu0 %v2488
    %2573 = vmatpush.bf16.msra.mxu0 %v2487
    %2574 = vmatmul.bf16.gmra.mxu0 %v2266
    %v2575 = vpop.f32.mrf.mxu0
    %v2576 = vadd.f32 %v2563, %v2575
    %v2577 = vpop.f32.mrf.mxu0
    %2578 = vdwg.mxu0
    %2579 = vst [vmem:[#allocation14] sm:$0x3] %v2576
    // Predicated region
    $region66: #{tpu_custom_call.1} parent=1 // pred_check
      _
    $region67: #{tpu_custom_call.1} parent=1 // pred_check_branch
      %2581 = sbr.rel (0) target = $region69
    $region68: #{tpu_custom_call.1} parent=1 // pred_region
      %2583 = vsyncadd [#allocation4], 0
      %s2585 = sshll.u32 [#allocation14], 4
      %s2586 = int_to_ptr.vmem [resolvable:$true] %s2585
      %s2587 = sshll.u32 %s9, 4
      %s2588 = int_to_ptr.hbm [resolvable:$true] %s2587
      %2590 = dma.vmem_to_hbm [thread:$0]  %s2586, 32, %s2588, [#allocation4]
    $region69: #{tpu_custom_call.1} parent=1 // pred_fallthru
      _
    // Predicated region
    $region70: #{tpu_custom_call.1} parent=1 // pred_check
      _
    $region71: #{tpu_custom_call.1} parent=1 // pred_check_branch
      %2592 = sbr.rel (0) target = $region73
    $region72: #{tpu_custom_call.1} parent=1 // pred_region
      %2594 = dma.done [#allocation4], 32
    $region73: #{tpu_custom_call.1} parent=1 // pred_fallthru
      _
    %2595 = vsyncpa [#allocation3], 1
    %2596 = vsyncpa [#allocation6], 1
    %2597 = vsyncpa [#allocation9], 1
    %2598 = vsyncpa [#allocation12], 1
    %2599 = vsyncpa [#allocation4], 1

</llo_original>
